<compile_context>
chip_gen: v7x
topology: tpu7x:2x2x1
jax: 0.10.0
libtpu: 0.0.40
codegen_flags: <defaults>
</compile_context>

<pallas_src>
import numpy as np
import jax
import jax.numpy as jnp
from jax import lax
from jax.experimental import pallas as pl
from jax.experimental.pallas import tpu as pltpu

# ---- problem sizes (small, consistent with the module) ----
S = 8        # seq_len
B = 2        # batch
D = 32       # encoder_embed_dim
H = 4        # encoder_attention_heads
HD = D // H
FFN = 64     # encoder_ffn_embed_dim
EPS = 1e-5
NEG_INF = -1e30
BS = B * S
SCALE = 1.0 / float(np.sqrt(HD))


def _layer_norm(x, g, b):
    mu = jnp.mean(x, axis=-1, keepdims=True)
    xc = x - mu
    var = jnp.mean(xc * xc, axis=-1, keepdims=True)
    return xc * lax.rsqrt(var + EPS) * g + b


def encoder_layer_kernel(x_ref, mask_ref, wa_ref, wf_ref, misc_ref, out_ref):
    x = x_ref[...]                              # (BS, D) f32, rows seq-major (s*B + b)
    misc = misc_ref[...]                        # (3, 128) f32
    bqkv = misc[0:1, 0:3 * D]                   # (1, 96)
    bo = misc[0:1, 3 * D:4 * D]                 # (1, 32)
    ln1g, ln1b = misc[1:2, 0:D], misc[1:2, D:2 * D]
    ln2g, ln2b = misc[1:2, 2 * D:3 * D], misc[1:2, 3 * D:4 * D]
    b1 = misc[2:3, 0:FFN]                       # (1, 64)
    b2 = misc[2:3, FFN:FFN + D]                 # (1, 32)

    # Additive attention mask: wrapper supplies (tiled src_mask + key-padding bias);
    # the cross-batch (block) structure for flattened tokens is generated here
    # from iotas (cheap VPU filler, saves one DMA + wrapper scatter).
    r = lax.broadcasted_iota(jnp.int32, (BS, BS), 0)
    c = lax.broadcasted_iota(jnp.int32, (BS, BS), 1)
    mask = mask_ref[...] + jnp.where((r % B) == (c % B), 0.0, NEG_INF)   # (BS, BS) f32

    w_attn = wa_ref[...]                        # (32, 128) bf16 = [wq*s | wk | wv | wo]
    wqkv = w_attn[:, 0:3 * D]
    wo = w_attn[:, 3 * D:4 * D]

    # ---- fused QKV in-projection (bf16 MXU operands, f32 accumulation) ----
    residual = x
    qkv = jnp.dot(x.astype(jnp.bfloat16), wqkv,
                  preferred_element_type=jnp.float32) + bqkv              # (BS, 3D) f32
    q = qkv[:, 0:D]                             # 1/sqrt(HD) already folded into wq/bq
    k = qkv[:, D:2 * D]
    v = qkv[:, 2 * D:3 * D]

    contract = (((1,), (1,)), ((), ()))         # a @ b^T without an XLU transpose
    attn_out = bo                               # (1, D) broadcasts over rows
    for h in range(H):
        sl = slice(h * HD, (h + 1) * HD)
        qh = q[:, sl].astype(jnp.bfloat16)
        kh = k[:, sl].astype(jnp.bfloat16)
        vh = v[:, sl].astype(jnp.bfloat16)
        scores = lax.dot_general(qh, kh, contract,
                                 preferred_element_type=jnp.float32) + mask
        scores = scores - jnp.max(scores, axis=-1, keepdims=True)
        p = jnp.exp(scores)
        p = p * pl.reciprocal(jnp.sum(p, axis=-1, keepdims=True), approx=True)
        ctx = jnp.dot(p.astype(jnp.bfloat16), vh,
                      preferred_element_type=jnp.float32)                 # (BS, HD)
        # ctx @ Wo == sum_h ctx_h @ Wo[h*HD:(h+1)*HD, :]: heads never leave vregs.
        attn_out = attn_out + jnp.dot(ctx.astype(jnp.bfloat16), wo[sl, :],
                                      preferred_element_type=jnp.float32)

    # residual + post layer-norm (f32)
    x = _layer_norm(residual + attn_out, ln1g, ln1b)

    # ---- feed-forward ----
    residual = x
    w_ffn = wf_ref[...]                         # (32, 128) bf16 = [w1 | w2^T]
    w1 = w_ffn[:, 0:FFN]                        # (32, 64)
    w2t = w_ffn[:, FFN:2 * FFN]                 # (32, 64) == w2^T
    h1 = jnp.maximum(
        jnp.dot(x.astype(jnp.bfloat16), w1, preferred_element_type=jnp.float32) + b1,
        0.0)
    h2 = lax.dot_general(h1.astype(jnp.bfloat16), w2t, contract,
                         preferred_element_type=jnp.float32) + b2          # (BS, D)
    x = _layer_norm(residual + h2, ln2g, ln2b)

    out_ref[...] = x.astype(out_ref.dtype)


# ---------------- parameter packing (done ONCE at init, not per forward) ----------------
def pack_params(p):
    wqkv = jnp.concatenate([p["wq"] * SCALE, p["wk"], p["wv"]], axis=1)   # (D, 3D)
    w_attn = jnp.concatenate([wqkv, p["wo"]], axis=1).astype(jnp.bfloat16)     # (32, 128)
    w_ffn = jnp.concatenate([p["w1"], p["w2"].T], axis=1).astype(jnp.bfloat16)  # (32, 128)
    row0 = jnp.concatenate([p["bq"] * SCALE, p["bk"], p["bv"], p["bo"]], axis=1)   # (1,128)
    row1 = jnp.concatenate([p["ln1g"], p["ln1b"], p["ln2g"], p["ln2b"]], axis=1)   # (1,128)
    row2 = jnp.concatenate([p["b1"], p["b2"],
                            jnp.zeros((1, 128 - FFN - D), jnp.float32)], axis=1)   # (1,128)
    misc = jnp.concatenate([row0, row1, row2], axis=0).astype(jnp.float32)         # (3,128)
    return {"w_attn": w_attn, "w_ffn": w_ffn, "misc": misc}


def transformer_encoder_layer(x_sbd, src_mask, pad_mask, packed):
    """x_sbd: (S, B, D) f32; src_mask: (S, S) additive f32;
    pad_mask: (B, S) {0,1} f32 (1 == padded key).  Returns (S, B, D)."""
    x = x_sbd.reshape(BS, D)                    # seq-major flatten: row = s*B + b (pure reshape)

    # Additive mask (no scatter): src_mask expanded so element (q,k) = src_mask[q//B, k//B],
    # plus per-key padding bias (key index = s*B + b). The cross-batch block mask is
    # generated inside the kernel.
    key_bias = jnp.where(pad_mask > 0, NEG_INF, 0.0).T.reshape(1, BS)      # (1, BS)
    src_big = jnp.repeat(jnp.repeat(src_mask, B, axis=0), B, axis=1)        # (BS, BS)
    mask2d = (src_big + key_bias).astype(jnp.float32)

    out = pl.pallas_call(
        encoder_layer_kernel,
        out_shape=jax.ShapeDtypeStruct((BS, D), jnp.float32),
        in_specs=[pl.BlockSpec(memory_space=pltpu.MemorySpace.VMEM) for _ in range(5)],
        out_specs=pl.BlockSpec(memory_space=pltpu.MemorySpace.VMEM),
    )(x, mask2d, packed["w_attn"], packed["w_ffn"], packed["misc"])

    return out.reshape(S, B, D)                 # pure reshape back to (S, B, D)


# ---------------- pure-JAX f32 reference (same math, batched, unpacked params) ----------------
def reference(x_sbd, src_mask, pad_mask, p):
    x = jnp.transpose(x_sbd, (1, 0, 2))         # (B, S, D)

    def ln(x, g, b):
        mu = x.mean(-1, keepdims=True)
        var = ((x - mu) ** 2).mean(-1, keepdims=True)
        return (x - mu) / jnp.sqrt(var + EPS) * g + b

    residual = x
    q = (x @ p["wq"] + p["bq"][0]) * SCALE
    k = x @ p["wk"] + p["bk"][0]
    v = x @ p["wv"] + p["bv"][0]
    q = q.reshape(B, S, H, HD).transpose(0, 2, 1, 3)
    k = k.reshape(B, S, H, HD).transpose(0, 2, 1, 3)
    v = v.reshape(B, S, H, HD).transpose(0, 2, 1, 3)
    scores = jnp.einsum("bhqd,bhkd->bhqk", q, k)
    scores = scores + src_mask[None, None]
    scores = scores + jnp.where(pad_mask[:, None, None, :] > 0, NEG_INF, 0.0)
    scores = scores - scores.max(-1, keepdims=True)
    pr = jnp.exp(scores)
    pr = pr / pr.sum(-1, keepdims=True)
    ctx = jnp.einsum("bhqk,bhkd->bhqd", pr, v).transpose(0, 2, 1, 3).reshape(B, S, D)
    attn_out = ctx @ p["wo"] + p["bo"][0]
    x = ln(residual + attn_out, p["ln1g"][0], p["ln1b"][0])
    residual = x
    h1 = jnp.maximum(x @ p["w1"] + p["b1"][0], 0.0)
    x = ln(residual + h1 @ p["w2"] + p["b2"][0], p["ln2g"][0], p["ln2b"][0])
    return jnp.transpose(x, (1, 0, 2))


# ---------------- deterministic parameter init ----------------
def xavier_uniform(key, shape):
    fan_in, fan_out = shape
    bound = float(np.sqrt(6.0 / (fan_in + fan_out)))
    return jax.random.uniform(key, shape, jnp.float32, -bound, bound)


def init_params(key):
    ks = jax.random.split(key, 8)
    return {
        # attention projections stored as (in, out) so the kernel does x @ W
        "wq": xavier_uniform(ks[0], (D, D)), "bq": jnp.zeros((1, D), jnp.float32),
        "wk": xavier_uniform(ks[1], (D, D)), "bk": jnp.zeros((1, D), jnp.float32),
        "wv": xavier_uniform(ks[2], (D, D)), "bv": jnp.zeros((1, D), jnp.float32),
        "wo": xavier_uniform(ks[3], (D, D)), "bo": jnp.zeros((1, D), jnp.float32),
        "ln1g": jnp.ones((1, D), jnp.float32), "ln1b": jnp.zeros((1, D), jnp.float32),
        "w1": xavier_uniform(ks[4], (D, FFN)), "b1": jnp.zeros((1, FFN), jnp.float32),
        "w2": xavier_uniform(ks[5], (FFN, D)), "b2": jnp.zeros((1, D), jnp.float32),
        "ln2g": jnp.ones((1, D), jnp.float32), "ln2b": jnp.zeros((1, D), jnp.float32),
    }


if __name__ == "__main__":
    key = jax.random.PRNGKey(0)
    kx, kp = jax.random.split(key)
    params = init_params(kp)
    packed = pack_params(params)        # hoisted out of the forward path (done once)

    x = jax.random.normal(kx, (S, B, D), jnp.float32)         # (seq, batch, dim)
    src_mask = jnp.zeros((S, S), jnp.float32)                 # additive attn_mask
    pad_mask = jnp.zeros((B, S), jnp.float32)
    pad_mask = pad_mask.at[1, -2:].set(1.0)                   # batch 1: last 2 tokens padded

    fwd = jax.jit(transformer_encoder_layer)
    out = jax.block_until_ready(fwd(x, src_mask, pad_mask, packed))

    ref = reference(x, src_mask, pad_mask, params)
    # bf16 MXU operands (f32 accumulation) -> slightly looser tolerance than pure f32.
    np.testing.assert_allclose(np.asarray(out), np.asarray(ref),
                               rtol=2e-2, atol=2e-2)
    assert out.shape == (S, B, D)
    print("KERNEL_OK")
</pallas_src>

<mosaic_0001>
module attributes {stable_mosaic.version = 11 : i64} {
  func.func @encoder_layer_kernel(%arg0: memref<16x32xf32, #tpu.memory_space<vmem>>, %arg1: memref<16x16xf32, #tpu.memory_space<vmem>>, %arg2: memref<32x128xbf16, #tpu.memory_space<vmem>>, %arg3: memref<32x128xbf16, #tpu.memory_space<vmem>>, %arg4: memref<3x128xf32, #tpu.memory_space<vmem>>, %arg5: memref<16x32xf32, #tpu.memory_space<vmem>>) attributes {dimension_semantics = [], scalar_prefetch = 0 : i64, scratch_operands = 0 : i64, tpu.core_type = #tpu.core_type<tc>} {
    %c0 = arith.constant 0 : index
    %c0_0 = arith.constant 0 : index
    %0 = vector.load %arg0[%c0, %c0_0] : memref<16x32xf32, #tpu.memory_space<vmem>>, vector<16x32xf32>
    %c0_1 = arith.constant 0 : index
    %c0_2 = arith.constant 0 : index
    %1 = vector.load %arg4[%c0_1, %c0_2] : memref<3x128xf32, #tpu.memory_space<vmem>>, vector<3x128xf32>
    %2 = vector.extract_strided_slice %1 {offsets = [0, 0], sizes = [1, 96], strides = [1, 1]} : vector<3x128xf32> to vector<1x96xf32>
    %3 = vector.extract_strided_slice %1 {offsets = [0, 96], sizes = [1, 32], strides = [1, 1]} : vector<3x128xf32> to vector<1x32xf32>
    %4 = vector.extract_strided_slice %1 {offsets = [1, 0], sizes = [1, 32], strides = [1, 1]} : vector<3x128xf32> to vector<1x32xf32>
    %5 = vector.extract_strided_slice %1 {offsets = [1, 32], sizes = [1, 32], strides = [1, 1]} : vector<3x128xf32> to vector<1x32xf32>
    %6 = vector.extract_strided_slice %1 {offsets = [1, 64], sizes = [1, 32], strides = [1, 1]} : vector<3x128xf32> to vector<1x32xf32>
    %7 = vector.extract_strided_slice %1 {offsets = [1, 96], sizes = [1, 32], strides = [1, 1]} : vector<3x128xf32> to vector<1x32xf32>
    %8 = vector.extract_strided_slice %1 {offsets = [2, 0], sizes = [1, 64], strides = [1, 1]} : vector<3x128xf32> to vector<1x64xf32>
    %9 = vector.extract_strided_slice %1 {offsets = [2, 64], sizes = [1, 32], strides = [1, 1]} : vector<3x128xf32> to vector<1x32xf32>
    %10 = tpu.iota {dimensions = array<i32: 0>} : vector<16x16xi32>
    %11 = tpu.iota {dimensions = array<i32: 1>} : vector<16x16xi32>
    %c0_3 = arith.constant 0 : index
    %c0_4 = arith.constant 0 : index
    %12 = vector.load %arg1[%c0_3, %c0_4] : memref<16x16xf32, #tpu.memory_space<vmem>>, vector<16x16xf32>
    %c2_i32 = arith.constant 2 : i32
    %c0_i32 = arith.constant 0 : i32
    %13 = arith.cmpi eq, %c2_i32, %c0_i32 : i32
    %c1_i32 = arith.constant 1 : i32
    %14 = arith.select %13, %c1_i32, %c2_i32 : i32
    %15 = vector.broadcast %14 : i32 to vector<16x16xi32>
    %16 = arith.remsi %10, %15 : vector<16x16xi32>
    %c0_i32_5 = arith.constant 0 : i32
    %17 = vector.broadcast %c0_i32_5 : i32 to vector<16x16xi32>
    %18 = arith.cmpi ne, %16, %17 : vector<16x16xi32>
    %c0_i32_6 = arith.constant 0 : i32
    %19 = vector.broadcast %c0_i32_6 : i32 to vector<16x16xi32>
    %20 = arith.cmpi slt, %16, %19 : vector<16x16xi32>
    %c0_i32_7 = arith.constant 0 : i32
    %21 = arith.cmpi slt, %14, %c0_i32_7 : i32
    %22 = vector.broadcast %21 : i1 to vector<16x16xi1>
    %23 = vector.broadcast %22 : vector<16x16xi1> to vector<16x16xi1>
    %24 = arith.xori %20, %23 : vector<16x16xi1>
    %25 = arith.andi %24, %18 : vector<16x16xi1>
    %26 = vector.broadcast %14 : i32 to vector<16x16xi32>
    %27 = arith.addi %16, %26 : vector<16x16xi32>
    %28 = arith.select %25, %27, %16 : vector<16x16xi1>, vector<16x16xi32>
    %c2_i32_8 = arith.constant 2 : i32
    %c0_i32_9 = arith.constant 0 : i32
    %29 = arith.cmpi eq, %c2_i32_8, %c0_i32_9 : i32
    %c1_i32_10 = arith.constant 1 : i32
    %30 = arith.select %29, %c1_i32_10, %c2_i32_8 : i32
    %31 = vector.broadcast %30 : i32 to vector<16x16xi32>
    %32 = arith.remsi %11, %31 : vector<16x16xi32>
    %c0_i32_11 = arith.constant 0 : i32
    %33 = vector.broadcast %c0_i32_11 : i32 to vector<16x16xi32>
    %34 = arith.cmpi ne, %32, %33 : vector<16x16xi32>
    %c0_i32_12 = arith.constant 0 : i32
    %35 = vector.broadcast %c0_i32_12 : i32 to vector<16x16xi32>
    %36 = arith.cmpi slt, %32, %35 : vector<16x16xi32>
    %c0_i32_13 = arith.constant 0 : i32
    %37 = arith.cmpi slt, %30, %c0_i32_13 : i32
    %38 = vector.broadcast %37 : i1 to vector<16x16xi1>
    %39 = vector.broadcast %38 : vector<16x16xi1> to vector<16x16xi1>
    %40 = arith.xori %36, %39 : vector<16x16xi1>
    %41 = arith.andi %40, %34 : vector<16x16xi1>
    %42 = vector.broadcast %30 : i32 to vector<16x16xi32>
    %43 = arith.addi %32, %42 : vector<16x16xi32>
    %44 = arith.select %41, %43, %32 : vector<16x16xi1>, vector<16x16xi32>
    %45 = arith.cmpi eq, %28, %44 : vector<16x16xi32>
    %cst = arith.constant 0.000000e+00 : f32
    %cst_14 = arith.constant -1.000000e+30 : f32
    %46 = vector.broadcast %cst : f32 to vector<16x16xf32>
    %47 = vector.broadcast %cst_14 : f32 to vector<16x16xf32>
    %48 = arith.select %45, %46, %47 : vector<16x16xi1>, vector<16x16xf32>
    %49 = arith.addf %12, %48 : vector<16x16xf32>
    %c0_15 = arith.constant 0 : index
    %c0_16 = arith.constant 0 : index
    %50 = vector.load %arg2[%c0_15, %c0_16] : memref<32x128xbf16, #tpu.memory_space<vmem>>, vector<32x128xbf16>
    %51 = vector.extract_strided_slice %50 {offsets = [0, 0], sizes = [32, 96], strides = [1, 1]} : vector<32x128xbf16> to vector<32x96xbf16>
    %52 = vector.extract_strided_slice %50 {offsets = [0, 96], sizes = [32, 32], strides = [1, 1]} : vector<32x128xbf16> to vector<32x32xbf16>
    %53 = arith.truncf %0 : vector<16x32xf32> to vector<16x32xbf16>
    %cst_17 = arith.constant dense<0.000000e+00> : vector<16x96xf32>
    %54 = tpu.matmul %53, %51, %cst_17 {dimension_numbers = #tpu.dot_dimension_numbers<[1], [0], [0], [1], [0, 0, 1, 1], [], []>} : vector<16x32xbf16>, vector<32x96xbf16>, vector<16x96xf32> -> vector<16x96xf32>
    %55 = vector.broadcast %2 : vector<1x96xf32> to vector<16x96xf32>
    %56 = arith.addf %54, %55 : vector<16x96xf32>
    %57 = vector.extract_strided_slice %56 {offsets = [0, 0], sizes = [16, 32], strides = [1, 1]} : vector<16x96xf32> to vector<16x32xf32>
    %58 = vector.extract_strided_slice %56 {offsets = [0, 32], sizes = [16, 32], strides = [1, 1]} : vector<16x96xf32> to vector<16x32xf32>
    %59 = vector.extract_strided_slice %56 {offsets = [0, 64], sizes = [16, 32], strides = [1, 1]} : vector<16x96xf32> to vector<16x32xf32>
    %60 = vector.extract_strided_slice %57 {offsets = [0, 0], sizes = [16, 8], strides = [1, 1]} : vector<16x32xf32> to vector<16x8xf32>
    %61 = arith.truncf %60 : vector<16x8xf32> to vector<16x8xbf16>
    %62 = vector.extract_strided_slice %58 {offsets = [0, 0], sizes = [16, 8], strides = [1, 1]} : vector<16x32xf32> to vector<16x8xf32>
    %63 = arith.truncf %62 : vector<16x8xf32> to vector<16x8xbf16>
    %64 = vector.extract_strided_slice %59 {offsets = [0, 0], sizes = [16, 8], strides = [1, 1]} : vector<16x32xf32> to vector<16x8xf32>
    %65 = arith.truncf %64 : vector<16x8xf32> to vector<16x8xbf16>
    %cst_18 = arith.constant dense<0.000000e+00> : vector<16x16xf32>
    %66 = tpu.matmul %61, %63, %cst_18 {dimension_numbers = #tpu.dot_dimension_numbers<[1], [1], [0], [0], [0, 0, 1, 0], [], []>} : vector<16x8xbf16>, vector<16x8xbf16>, vector<16x16xf32> -> vector<16x16xf32>
    %67 = arith.addf %66, %49 : vector<16x16xf32>
    %cst_19 = arith.constant dense<0xFF800000> : vector<16xf32>
    %68 = vector.multi_reduction <maximumf>, %67, %cst_19 [1] : vector<16x16xf32> to vector<16xf32>
    %69 = vector.shape_cast %68 : vector<16xf32> to vector<16x1xf32>
    %70 = vector.broadcast %69 : vector<16x1xf32> to vector<16x16xf32>
    %71 = arith.subf %67, %70 : vector<16x16xf32>
    %72 = math.exp %71 : vector<16x16xf32>
    %cst_20 = arith.constant dense<0.000000e+00> : vector<16xf32>
    %73 = vector.multi_reduction <add>, %72, %cst_20 [1] : vector<16x16xf32> to vector<16xf32>
    %74 = vector.shape_cast %73 : vector<16xf32> to vector<16x1xf32>
    %75 = tpu.reciprocal %74 {approx = true} : vector<16x1xf32> -> vector<16x1xf32>
    %76 = vector.broadcast %75 : vector<16x1xf32> to vector<16x16xf32>
    %77 = arith.mulf %72, %76 : vector<16x16xf32>
    %78 = arith.truncf %77 : vector<16x16xf32> to vector<16x16xbf16>
    %cst_21 = arith.constant dense<0.000000e+00> : vector<16x8xf32>
    %79 = tpu.matmul %78, %65, %cst_21 {dimension_numbers = #tpu.dot_dimension_numbers<[1], [0], [0], [1], [0, 0, 1, 1], [], []>} : vector<16x16xbf16>, vector<16x8xbf16>, vector<16x8xf32> -> vector<16x8xf32>
    %80 = arith.truncf %79 : vector<16x8xf32> to vector<16x8xbf16>
    %81 = vector.extract_strided_slice %52 {offsets = [0, 0], sizes = [8, 32], strides = [1, 1]} : vector<32x32xbf16> to vector<8x32xbf16>
    %cst_22 = arith.constant dense<0.000000e+00> : vector<16x32xf32>
    %82 = tpu.matmul %80, %81, %cst_22 {dimension_numbers = #tpu.dot_dimension_numbers<[1], [0], [0], [1], [0, 0, 1, 1], [], []>} : vector<16x8xbf16>, vector<8x32xbf16>, vector<16x32xf32> -> vector<16x32xf32>
    %83 = vector.broadcast %3 : vector<1x32xf32> to vector<16x32xf32>
    %84 = arith.addf %83, %82 : vector<16x32xf32>
    %85 = vector.extract_strided_slice %57 {offsets = [0, 8], sizes = [16, 8], strides = [1, 1]} : vector<16x32xf32> to vector<16x8xf32>
    %86 = arith.truncf %85 : vector<16x8xf32> to vector<16x8xbf16>
    %87 = vector.extract_strided_slice %58 {offsets = [0, 8], sizes = [16, 8], strides = [1, 1]} : vector<16x32xf32> to vector<16x8xf32>
    %88 = arith.truncf %87 : vector<16x8xf32> to vector<16x8xbf16>
    %89 = vector.extract_strided_slice %59 {offsets = [0, 8], sizes = [16, 8], strides = [1, 1]} : vector<16x32xf32> to vector<16x8xf32>
    %90 = arith.truncf %89 : vector<16x8xf32> to vector<16x8xbf16>
    %cst_23 = arith.constant dense<0.000000e+00> : vector<16x16xf32>
    %91 = tpu.matmul %86, %88, %cst_23 {dimension_numbers = #tpu.dot_dimension_numbers<[1], [1], [0], [0], [0, 0, 1, 0], [], []>} : vector<16x8xbf16>, vector<16x8xbf16>, vector<16x16xf32> -> vector<16x16xf32>
    %92 = arith.addf %91, %49 : vector<16x16xf32>
    %cst_24 = arith.constant dense<0xFF800000> : vector<16xf32>
    %93 = vector.multi_reduction <maximumf>, %92, %cst_24 [1] : vector<16x16xf32> to vector<16xf32>
    %94 = vector.shape_cast %93 : vector<16xf32> to vector<16x1xf32>
    %95 = vector.broadcast %94 : vector<16x1xf32> to vector<16x16xf32>
    %96 = arith.subf %92, %95 : vector<16x16xf32>
    %97 = math.exp %96 : vector<16x16xf32>
    %cst_25 = arith.constant dense<0.000000e+00> : vector<16xf32>
    %98 = vector.multi_reduction <add>, %97, %cst_25 [1] : vector<16x16xf32> to vector<16xf32>
    %99 = vector.shape_cast %98 : vector<16xf32> to vector<16x1xf32>
    %100 = tpu.reciprocal %99 {approx = true} : vector<16x1xf32> -> vector<16x1xf32>
    %101 = vector.broadcast %100 : vector<16x1xf32> to vector<16x16xf32>
    %102 = arith.mulf %97, %101 : vector<16x16xf32>
    %103 = arith.truncf %102 : vector<16x16xf32> to vector<16x16xbf16>
    %cst_26 = arith.constant dense<0.000000e+00> : vector<16x8xf32>
    %104 = tpu.matmul %103, %90, %cst_26 {dimension_numbers = #tpu.dot_dimension_numbers<[1], [0], [0], [1], [0, 0, 1, 1], [], []>} : vector<16x16xbf16>, vector<16x8xbf16>, vector<16x8xf32> -> vector<16x8xf32>
    %105 = arith.truncf %104 : vector<16x8xf32> to vector<16x8xbf16>
    %106 = vector.extract_strided_slice %52 {offsets = [8, 0], sizes = [8, 32], strides = [1, 1]} : vector<32x32xbf16> to vector<8x32xbf16>
    %cst_27 = arith.constant dense<0.000000e+00> : vector<16x32xf32>
    %107 = tpu.matmul %105, %106, %cst_27 {dimension_numbers = #tpu.dot_dimension_numbers<[1], [0], [0], [1], [0, 0, 1, 1], [], []>} : vector<16x8xbf16>, vector<8x32xbf16>, vector<16x32xf32> -> vector<16x32xf32>
    %108 = arith.addf %84, %107 : vector<16x32xf32>
    %109 = vector.extract_strided_slice %57 {offsets = [0, 16], sizes = [16, 8], strides = [1, 1]} : vector<16x32xf32> to vector<16x8xf32>
    %110 = arith.truncf %109 : vector<16x8xf32> to vector<16x8xbf16>
    %111 = vector.extract_strided_slice %58 {offsets = [0, 16], sizes = [16, 8], strides = [1, 1]} : vector<16x32xf32> to vector<16x8xf32>
    %112 = arith.truncf %111 : vector<16x8xf32> to vector<16x8xbf16>
    %113 = vector.extract_strided_slice %59 {offsets = [0, 16], sizes = [16, 8], strides = [1, 1]} : vector<16x32xf32> to vector<16x8xf32>
    %114 = arith.truncf %113 : vector<16x8xf32> to vector<16x8xbf16>
    %cst_28 = arith.constant dense<0.000000e+00> : vector<16x16xf32>
    %115 = tpu.matmul %110, %112, %cst_28 {dimension_numbers = #tpu.dot_dimension_numbers<[1], [1], [0], [0], [0, 0, 1, 0], [], []>} : vector<16x8xbf16>, vector<16x8xbf16>, vector<16x16xf32> -> vector<16x16xf32>
    %116 = arith.addf %115, %49 : vector<16x16xf32>
    %cst_29 = arith.constant dense<0xFF800000> : vector<16xf32>
    %117 = vector.multi_reduction <maximumf>, %116, %cst_29 [1] : vector<16x16xf32> to vector<16xf32>
    %118 = vector.shape_cast %117 : vector<16xf32> to vector<16x1xf32>
    %119 = vector.broadcast %118 : vector<16x1xf32> to vector<16x16xf32>
    %120 = arith.subf %116, %119 : vector<16x16xf32>
    %121 = math.exp %120 : vector<16x16xf32>
    %cst_30 = arith.constant dense<0.000000e+00> : vector<16xf32>
    %122 = vector.multi_reduction <add>, %121, %cst_30 [1] : vector<16x16xf32> to vector<16xf32>
    %123 = vector.shape_cast %122 : vector<16xf32> to vector<16x1xf32>
    %124 = tpu.reciprocal %123 {approx = true} : vector<16x1xf32> -> vector<16x1xf32>
    %125 = vector.broadcast %124 : vector<16x1xf32> to vector<16x16xf32>
    %126 = arith.mulf %121, %125 : vector<16x16xf32>
    %127 = arith.truncf %126 : vector<16x16xf32> to vector<16x16xbf16>
    %cst_31 = arith.constant dense<0.000000e+00> : vector<16x8xf32>
    %128 = tpu.matmul %127, %114, %cst_31 {dimension_numbers = #tpu.dot_dimension_numbers<[1], [0], [0], [1], [0, 0, 1, 1], [], []>} : vector<16x16xbf16>, vector<16x8xbf16>, vector<16x8xf32> -> vector<16x8xf32>
    %129 = arith.truncf %128 : vector<16x8xf32> to vector<16x8xbf16>
    %130 = vector.extract_strided_slice %52 {offsets = [16, 0], sizes = [8, 32], strides = [1, 1]} : vector<32x32xbf16> to vector<8x32xbf16>
    %cst_32 = arith.constant dense<0.000000e+00> : vector<16x32xf32>
    %131 = tpu.matmul %129, %130, %cst_32 {dimension_numbers = #tpu.dot_dimension_numbers<[1], [0], [0], [1], [0, 0, 1, 1], [], []>} : vector<16x8xbf16>, vector<8x32xbf16>, vector<16x32xf32> -> vector<16x32xf32>
    %132 = arith.addf %108, %131 : vector<16x32xf32>
    %133 = vector.extract_strided_slice %57 {offsets = [0, 24], sizes = [16, 8], strides = [1, 1]} : vector<16x32xf32> to vector<16x8xf32>
    %134 = arith.truncf %133 : vector<16x8xf32> to vector<16x8xbf16>
    %135 = vector.extract_strided_slice %58 {offsets = [0, 24], sizes = [16, 8], strides = [1, 1]} : vector<16x32xf32> to vector<16x8xf32>
    %136 = arith.truncf %135 : vector<16x8xf32> to vector<16x8xbf16>
    %137 = vector.extract_strided_slice %59 {offsets = [0, 24], sizes = [16, 8], strides = [1, 1]} : vector<16x32xf32> to vector<16x8xf32>
    %138 = arith.truncf %137 : vector<16x8xf32> to vector<16x8xbf16>
    %cst_33 = arith.constant dense<0.000000e+00> : vector<16x16xf32>
    %139 = tpu.matmul %134, %136, %cst_33 {dimension_numbers = #tpu.dot_dimension_numbers<[1], [1], [0], [0], [0, 0, 1, 0], [], []>} : vector<16x8xbf16>, vector<16x8xbf16>, vector<16x16xf32> -> vector<16x16xf32>
    %140 = arith.addf %139, %49 : vector<16x16xf32>
    %cst_34 = arith.constant dense<0xFF800000> : vector<16xf32>
    %141 = vector.multi_reduction <maximumf>, %140, %cst_34 [1] : vector<16x16xf32> to vector<16xf32>
    %142 = vector.shape_cast %141 : vector<16xf32> to vector<16x1xf32>
    %143 = vector.broadcast %142 : vector<16x1xf32> to vector<16x16xf32>
    %144 = arith.subf %140, %143 : vector<16x16xf32>
    %145 = math.exp %144 : vector<16x16xf32>
    %cst_35 = arith.constant dense<0.000000e+00> : vector<16xf32>
    %146 = vector.multi_reduction <add>, %145, %cst_35 [1] : vector<16x16xf32> to vector<16xf32>
    %147 = vector.shape_cast %146 : vector<16xf32> to vector<16x1xf32>
    %148 = tpu.reciprocal %147 {approx = true} : vector<16x1xf32> -> vector<16x1xf32>
    %149 = vector.broadcast %148 : vector<16x1xf32> to vector<16x16xf32>
    %150 = arith.mulf %145, %149 : vector<16x16xf32>
    %151 = arith.truncf %150 : vector<16x16xf32> to vector<16x16xbf16>
    %cst_36 = arith.constant dense<0.000000e+00> : vector<16x8xf32>
    %152 = tpu.matmul %151, %138, %cst_36 {dimension_numbers = #tpu.dot_dimension_numbers<[1], [0], [0], [1], [0, 0, 1, 1], [], []>} : vector<16x16xbf16>, vector<16x8xbf16>, vector<16x8xf32> -> vector<16x8xf32>
    %153 = arith.truncf %152 : vector<16x8xf32> to vector<16x8xbf16>
    %154 = vector.extract_strided_slice %52 {offsets = [24, 0], sizes = [8, 32], strides = [1, 1]} : vector<32x32xbf16> to vector<8x32xbf16>
    %cst_37 = arith.constant dense<0.000000e+00> : vector<16x32xf32>
    %155 = tpu.matmul %153, %154, %cst_37 {dimension_numbers = #tpu.dot_dimension_numbers<[1], [0], [0], [1], [0, 0, 1, 1], [], []>} : vector<16x8xbf16>, vector<8x32xbf16>, vector<16x32xf32> -> vector<16x32xf32>
    %156 = arith.addf %132, %155 : vector<16x32xf32>
    %157 = arith.addf %0, %156 : vector<16x32xf32>
    %cst_38 = arith.constant dense<0.000000e+00> : vector<16xf32>
    %158 = vector.multi_reduction <add>, %157, %cst_38 [1] : vector<16x32xf32> to vector<16xf32>
    %159 = vector.shape_cast %158 : vector<16xf32> to vector<16x1xf32>
    %cst_39 = arith.constant 3.200000e+01 : f32
    %160 = vector.broadcast %cst_39 : f32 to vector<16x1xf32>
    %161 = arith.divf %159, %160 : vector<16x1xf32>
    %162 = vector.broadcast %161 : vector<16x1xf32> to vector<16x32xf32>
    %163 = arith.subf %157, %162 : vector<16x32xf32>
    %164 = arith.mulf %163, %163 : vector<16x32xf32>
    %cst_40 = arith.constant dense<0.000000e+00> : vector<16xf32>
    %165 = vector.multi_reduction <add>, %164, %cst_40 [1] : vector<16x32xf32> to vector<16xf32>
    %166 = vector.shape_cast %165 : vector<16xf32> to vector<16x1xf32>
    %cst_41 = arith.constant 3.200000e+01 : f32
    %167 = vector.broadcast %cst_41 : f32 to vector<16x1xf32>
    %168 = arith.divf %166, %167 : vector<16x1xf32>
    %cst_42 = arith.constant 9.99999974E-6 : f32
    %169 = vector.broadcast %cst_42 : f32 to vector<16x1xf32>
    %170 = arith.addf %168, %169 : vector<16x1xf32>
    %171 = math.rsqrt %170 : vector<16x1xf32>
    %172 = vector.broadcast %171 : vector<16x1xf32> to vector<16x32xf32>
    %173 = arith.mulf %163, %172 : vector<16x32xf32>
    %174 = vector.broadcast %4 : vector<1x32xf32> to vector<16x32xf32>
    %175 = arith.mulf %173, %174 : vector<16x32xf32>
    %176 = vector.broadcast %5 : vector<1x32xf32> to vector<16x32xf32>
    %177 = arith.addf %175, %176 : vector<16x32xf32>
    %c0_43 = arith.constant 0 : index
    %c0_44 = arith.constant 0 : index
    %178 = vector.load %arg3[%c0_43, %c0_44] : memref<32x128xbf16, #tpu.memory_space<vmem>>, vector<32x128xbf16>
    %179 = vector.extract_strided_slice %178 {offsets = [0, 0], sizes = [32, 64], strides = [1, 1]} : vector<32x128xbf16> to vector<32x64xbf16>
    %180 = vector.extract_strided_slice %178 {offsets = [0, 64], sizes = [32, 64], strides = [1, 1]} : vector<32x128xbf16> to vector<32x64xbf16>
    %181 = arith.truncf %177 : vector<16x32xf32> to vector<16x32xbf16>
    %cst_45 = arith.constant dense<0.000000e+00> : vector<16x64xf32>
    %182 = tpu.matmul %181, %179, %cst_45 {dimension_numbers = #tpu.dot_dimension_numbers<[1], [0], [0], [1], [0, 0, 1, 1], [], []>} : vector<16x32xbf16>, vector<32x64xbf16>, vector<16x64xf32> -> vector<16x64xf32>
    %183 = vector.broadcast %8 : vector<1x64xf32> to vector<16x64xf32>
    %184 = arith.addf %182, %183 : vector<16x64xf32>
    %cst_46 = arith.constant 0.000000e+00 : f32
    %185 = vector.broadcast %cst_46 : f32 to vector<16x64xf32>
    %186 = arith.maximumf %184, %185 : vector<16x64xf32>
    %187 = arith.truncf %186 : vector<16x64xf32> to vector<16x64xbf16>
    %cst_47 = arith.constant dense<0.000000e+00> : vector<16x32xf32>
    %188 = tpu.matmul %187, %180, %cst_47 {dimension_numbers = #tpu.dot_dimension_numbers<[1], [1], [0], [0], [0, 0, 1, 0], [], []>} : vector<16x64xbf16>, vector<32x64xbf16>, vector<16x32xf32> -> vector<16x32xf32>
    %189 = vector.broadcast %9 : vector<1x32xf32> to vector<16x32xf32>
    %190 = arith.addf %188, %189 : vector<16x32xf32>
    %191 = arith.addf %177, %190 : vector<16x32xf32>
    %cst_48 = arith.constant dense<0.000000e+00> : vector<16xf32>
    %192 = vector.multi_reduction <add>, %191, %cst_48 [1] : vector<16x32xf32> to vector<16xf32>
    %193 = vector.shape_cast %192 : vector<16xf32> to vector<16x1xf32>
    %cst_49 = arith.constant 3.200000e+01 : f32
    %194 = vector.broadcast %cst_49 : f32 to vector<16x1xf32>
    %195 = arith.divf %193, %194 : vector<16x1xf32>
    %196 = vector.broadcast %195 : vector<16x1xf32> to vector<16x32xf32>
    %197 = arith.subf %191, %196 : vector<16x32xf32>
    %198 = arith.mulf %197, %197 : vector<16x32xf32>
    %cst_50 = arith.constant dense<0.000000e+00> : vector<16xf32>
    %199 = vector.multi_reduction <add>, %198, %cst_50 [1] : vector<16x32xf32> to vector<16xf32>
    %200 = vector.shape_cast %199 : vector<16xf32> to vector<16x1xf32>
    %cst_51 = arith.constant 3.200000e+01 : f32
    %201 = vector.broadcast %cst_51 : f32 to vector<16x1xf32>
    %202 = arith.divf %200, %201 : vector<16x1xf32>
    %cst_52 = arith.constant 9.99999974E-6 : f32
    %203 = vector.broadcast %cst_52 : f32 to vector<16x1xf32>
    %204 = arith.addf %202, %203 : vector<16x1xf32>
    %205 = math.rsqrt %204 : vector<16x1xf32>
    %206 = vector.broadcast %205 : vector<16x1xf32> to vector<16x32xf32>
    %207 = arith.mulf %197, %206 : vector<16x32xf32>
    %208 = vector.broadcast %6 : vector<1x32xf32> to vector<16x32xf32>
    %209 = arith.mulf %207, %208 : vector<16x32xf32>
    %210 = vector.broadcast %7 : vector<1x32xf32> to vector<16x32xf32>
    %211 = arith.addf %209, %210 : vector<16x32xf32>
    %c0_53 = arith.constant 0 : index
    %c0_54 = arith.constant 0 : index
    %212 = vector.load %arg5[%c0_53, %c0_54] : memref<16x32xf32, #tpu.memory_space<vmem>>, vector<16x32xf32>
    tpu.vector_store %arg5[%c0_53, %c0_54], %211 {strides = array<i32>} : memref<16x32xf32, #tpu.memory_space<vmem>>, vector<16x32xf32>,
    return
  }
}

</mosaic_0001>

<llo_original>
// kernel: transformer_encoder_layer.1
$region0: #{transformer_encoder_layer.1}
  #allocation0 [shape = 'u32[]', space=smem, size = 0x4, offset = 0x4, fixed_abs, tag = 'smem constant byte address 0x4 - core index']
  #allocation1 [shape = 'u32[144,128]{1,0:T(1,128)}', space=vmem, size = 0x12000, scoped, tag = 'internal scratch']
  %s0 = inlined_call_operand.vmem [shape: f32[16,32], index: 0, kind: input, shape index: {}]
  %s1 = inlined_call_operand.vmem [shape: f32[16,16], index: 1, kind: input, shape index: {}]
  %s2 = inlined_call_operand.vmem [shape: bf16[32,128], index: 2, kind: input, shape index: {}]
  %s3 = inlined_call_operand.vmem [shape: bf16[32,128], index: 3, kind: input, shape index: {}]
  %s4 = inlined_call_operand.vmem [shape: f32[3,128], index: 4, kind: input, shape index: {}]
  %s5 = inlined_call_operand.hbm [shape: f32[16,32], index: 5, kind: output, shape index: {}]
  %s6 = sld [smem:[#allocation0]]
  $region30: #{transformer_encoder_layer.1} parent=0
    _
  %s8 = ssub.s32 1, %s6
  %s9 = scalar_select 0, %s8, %s6
  $region1: #{transformer_encoder_layer.1} parent=0
    #allocation2 [shape = 'u8[8192]{0}', space=vmem, size = 0x2000, scoped, tag = 'output window, operand 0, single buffered']
    #allocation3 [shape = 's32[1]{0}', space=sflag, size = 0x4, scoped, tag = 'scoped memory for transformer_encoder_layer.1']
    %10 = vsyncpa [#allocation3], 0
    // Predicated region
    $region2: #{transformer_encoder_layer.1} parent=1 // pred_check
      _
    $region3: #{transformer_encoder_layer.1} parent=1 // pred_check_branch
      %12 = sbr.rel (0) target = $region5
    $region4: #{transformer_encoder_layer.1} parent=1 // pred_region
      _
    $region5: #{transformer_encoder_layer.1} parent=1 // pred_fallthru
      _
    // Predicated region
    $region6: #{transformer_encoder_layer.1} parent=1 // pred_check
      _
    $region7: #{transformer_encoder_layer.1} parent=1 // pred_check_branch
      %14 = sbr.rel (0) target = $region9
    $region8: #{transformer_encoder_layer.1} parent=1 // pred_region
      _
    $region9: #{transformer_encoder_layer.1} parent=1 // pred_fallthru
      _
    // Predicated region
    $region10: #{transformer_encoder_layer.1} parent=1 // pred_check
      _
    $region11: #{transformer_encoder_layer.1} parent=1 // pred_check_branch
      %16 = sbr.rel (0) target = $region13
    $region12: #{transformer_encoder_layer.1} parent=1 // pred_region
      _
    $region13: #{transformer_encoder_layer.1} parent=1 // pred_fallthru
      _
    // Predicated region
    $region14: #{transformer_encoder_layer.1} parent=1 // pred_check
      _
    $region15: #{transformer_encoder_layer.1} parent=1 // pred_check_branch
      %18 = sbr.rel (0) target = $region17
    $region16: #{transformer_encoder_layer.1} parent=1 // pred_region
      _
    $region17: #{transformer_encoder_layer.1} parent=1 // pred_fallthru
      _
    // Predicated region
    $region18: #{transformer_encoder_layer.1} parent=1 // pred_check
      _
    $region19: #{transformer_encoder_layer.1} parent=1 // pred_check_branch
      %20 = sbr.rel (0) target = $region21
    $region20: #{transformer_encoder_layer.1} parent=1 // pred_region
      _
    $region21: #{transformer_encoder_layer.1} parent=1 // pred_fallthru
      _
    %v22 = vld [vmem:[%s0] sm:$0xff]
    %v23 = vld [vmem:[%s0 + $0x8] sm:$0xff]
    %v24 = vld [vmem:[%s4] sm:$0x7]
    %v25 = vlaneseq
    %v26 = vshrl.u32 %v25, 7
    %v27 = vadd.s32 %v26, 8
    %v28 = vlaneseq
    %v29 = vand.u32 %v28, 127
    %v30 = vld [vmem:[%s1] sm:$0xff]
    %v31 = vld [vmem:[%s1 + $0x8] sm:$0xff]
    %vm32 = vcmp.lt.s32.totalorder %v26, 0
    %v33 = vsub.s32 0, %v26
    %v34 = vsel %vm32, %v33, %v26
    %v35 = vshrl.u32 %v34, 1
    %v36 = vand.u32 %v34, 1
    %v37 = vsub.s32 0, %v36
    %v38 = vsel %vm32, %v37, %v36
    %vm39 = vcmp.lt.s32.totalorder %v27, 0
    %v40 = vsub.s32 0, %v27
    %v41 = vsel %vm39, %v40, %v27
    %v42 = vshrl.u32 %v41, 1
    %v43 = vand.u32 %v41, 1
    %v44 = vsub.s32 0, %v43
    %v45 = vsel %vm39, %v44, %v43
    %vm46 = vcmp.ne.s32.totalorder %v38, 0
    %vm47 = vcmp.ne.s32.totalorder %v45, 0
    %vm48 = vcmp.lt.s32.totalorder %v38, 0
    %vm49 = vcmp.lt.s32.totalorder %v45, 0
    %vm50 = vmand %vm48, %vm46
    %vm51 = vmand %vm49, %vm47
    %v52 = vadd.s32 %v38, 2
    %v53 = vadd.s32 %v45, 2
    %v54 = vsel %vm50, %v52, %v38
    %v55 = vsel %vm51, %v53, %v45
    %vm56 = vcmp.lt.s32.totalorder %v29, 0
    %v57 = vsub.s32 0, %v29
    %v58 = vsel %vm56, %v57, %v29
    %v59 = vshrl.u32 %v58, 1
    %v60 = vand.u32 %v58, 1
    %v61 = vsub.s32 0, %v60
    %v62 = vsel %vm56, %v61, %v60
    %vm63 = vcmp.ne.s32.totalorder %v62, 0
    %vm64 = vcmp.lt.s32.totalorder %v62, 0
    %vm65 = vmand %vm64, %vm63
    %v66 = vadd.s32 %v62, 2
    %v67 = vsel %vm65, %v66, %v62
    %vm68 = vcmp.eq.s32.totalorder %v54, %v67
    %vm69 = vcmp.eq.s32.totalorder %v55, %v67
    %v70 = vsel %vm68, 0.0, -1e+30
    %v71 = vsel %vm69, 0.0, -1e+30
    %v72 = vadd.f32 %v30, %v70
    %v73 = vadd.f32 %v31, %v71
    %v74 = vld [vmem:[%s2] sm:$0xf]
    %v75 = vld [vmem:[%s2 + $0x4] sm:$0xf]
    %v76 = vld [vmem:[%s2 + $0x8] sm:$0xf]
    %v77 = vld [vmem:[%s2 + $0xc] sm:$0xf]
    %v78 = vpack.c.bf16 %v23, %v22
    %v79 = vlaneseq
    %v80 = vshrl.u32 %v79, 7
    %v81 = vsub.s32 0, %v80
    %v82 = vrot.slane %v24, %v81
    %v87 = vunpack.c.l.b16 %v74
    %v88 = vunpack.c.l.b16 %v75
    %v89 = vunpack.c.l.b16 %v76
    %v90 = vunpack.c.l.b16 %v77
    %v91 = vpack.c.b16 %v88, %v87
    %v92 = vpack.c.b16 %v90, %v89
    %vm95 = vcmask 261120
    %v97 = vsel %vm95, %v78, 0
    %99 = vmatprep.subr.bf16.mxu0 0
    %100 = vmatpush1.bf16.msra.mxu0 %v91
    %101 = vmatprep.subr.bf16.mxu0 0
    %102 = vmatpush1.bf16.msra.mxu0 %v92
    %103 = vmatprep.subr.bf16.mxu0 0
    %104 = vmatpush1.bf16.msra.mxu0 0
    %105 = vmatprep.subr.bf16.mxu0 0
    %106 = vmatpush1.bf16.msra.mxu0 0
    %107 = vmatprep.subr.bf16.mxu0 0
    %108 = vmatpush1.bf16.msra.mxu0 0
    %109 = vmatprep.subr.bf16.mxu0 0
    %110 = vmatpush1.bf16.msra.mxu0 0
    %111 = vmatprep.subr.bf16.mxu0 0
    %112 = vmatpush1.bf16.msra.mxu0 0
    %113 = vmatprep.subr.bf16.mxu0 0
    %114 = vmatpush1.bf16.msra.mxu0 0
    %115 = vmatprep.subr.bf16.mxu0 0
    %116 = vmatpush1.bf16.msra.mxu0 0
    %117 = vmatprep.subr.bf16.mxu0 0
    %118 = vmatpush1.bf16.msra.mxu0 0
    %119 = vmatprep.subr.bf16.mxu0 0
    %120 = vmatpush1.bf16.msra.mxu0 0
    %121 = vmatprep.subr.bf16.mxu0 0
    %122 = vmatpush1.bf16.msra.mxu0 0
    %123 = vmatprep.subr.bf16.mxu0 0
    %124 = vmatpush1.bf16.msra.mxu0 0
    %125 = vmatprep.subr.bf16.mxu0 0
    %126 = vmatpush1.bf16.msra.mxu0 0
    %127 = vmatprep.subr.bf16.mxu0 0
    %128 = vmatpush1.bf16.msra.mxu0 0
    %129 = vmatprep.subr.bf16.mxu0 0
    %130 = vmatpush1.bf16.msra.mxu0 0
    %131 = vmatprep.mubr.bf16.mxu0 0
    %132 = vmatmul.mubr.bf16.gmra.mrb[0].mxu0 %v97
    %v133 = vpop.f32.mrb[0].mxu0
    %v134 = vadd.f32 %v82, %v133
    %v135 = vpop.f32.mrb[0].mxu0
    %v136 = vpop.f32.mrb[0].mxu0
    %v137 = vadd.f32 %v82, %v136
    %v138 = vpop.f32.mrb[0].mxu0
    %139 = vdwg.mxu0
    %v140 = vpack.c.bf16 %v137, %v134
    %142 = vrot.lane.b32.xlu0 %v140, 96
    %v143 = vpop.permute.xlu0 %142
    %vm144 = vcmask 64512
    %v146 = vsel %vm144, %v140, 0
    %v149 = vsel %vm144, %v143, 0
    %151 = vmatprep.subr.bf16.mxu0 0
    %152 = vmatpush1.bf16.xpose.msra.mxu0 %v149
    %153 = vmatprep.subr.bf16.mxu0 0
    %154 = vmatpush1.bf16.xpose.msra.mxu0 0
    %155 = vmatprep.subr.bf16.mxu0 0
    %156 = vmatpush1.bf16.xpose.msra.mxu0 0
    %157 = vmatprep.subr.bf16.mxu0 0
    %158 = vmatpush1.bf16.xpose.msra.mxu0 0
    %159 = vmatprep.subr.bf16.mxu0 0
    %160 = vmatpush1.bf16.xpose.msra.mxu0 0
    %161 = vmatprep.subr.bf16.mxu0 0
    %162 = vmatpush1.bf16.xpose.msra.mxu0 0
    %163 = vmatprep.subr.bf16.mxu0 0
    %164 = vmatpush1.bf16.xpose.msra.mxu0 0
    %165 = vmatprep.subr.bf16.mxu0 0
    %166 = vmatpush1.bf16.xpose.msra.mxu0 0
    %167 = vmatprep.subr.bf16.mxu0 0
    %168 = vmatpush1.bf16.xpose.msra.mxu0 0
    %169 = vmatprep.subr.bf16.mxu0 0
    %170 = vmatpush1.bf16.xpose.msra.mxu0 0
    %171 = vmatprep.subr.bf16.mxu0 0
    %172 = vmatpush1.bf16.xpose.msra.mxu0 0
    %173 = vmatprep.subr.bf16.mxu0 0
    %174 = vmatpush1.bf16.xpose.msra.mxu0 0
    %175 = vmatprep.subr.bf16.mxu0 0
    %176 = vmatpush1.bf16.xpose.msra.mxu0 0
    %177 = vmatprep.subr.bf16.mxu0 0
    %178 = vmatpush1.bf16.xpose.msra.mxu0 0
    %179 = vmatprep.subr.bf16.mxu0 0
    %180 = vmatpush1.bf16.xpose.msra.mxu0 0
    %181 = vmatprep.subr.bf16.mxu0 0
    %182 = vmatpush1.bf16.xpose.msra.mxu0 0
    %183 = vmatprep.mubr.bf16.mxu0 0
    %184 = vmatmul.mubr.bf16.gmra.mrb[0].mxu0 %v146
    %v185 = vpop.f32.mrb[0].mxu0
    %v186 = vadd.f32 %v72, %v185
    %v187 = vpop.f32.mrb[0].mxu0
    %v188 = vpop.f32.mrb[0].mxu0
    %v189 = vadd.f32 %v73, %v188
    %v190 = vpop.f32.mrb[0].mxu0
    %191 = vdwg.mxu0
    %vm192 = vcmask 130048
    %v193 = vsel %vm192, %v186, -inf
    %194 = vmax.xlane.f32.xlu0 %v193
    %v195 = vpop.xlane.xlu0 %194
    %v196 = vsel %vm192, %v189, -inf
    %197 = vmax.xlane.f32.xlu0 %v196
    %v198 = vpop.xlane.xlu0 %197
    %v199 = vsub.f32 %v186, %v195
    %v200 = vsub.f32 %v189, %v198
    %v201 = vmul.f32 %v199, 1.442695
    %v202 = vpow.pop %v201
    %v203 = vmul.f32 %v200, 1.442695
    %v204 = vpow.pop %v203
    %v205 = vsel %vm192, %v202, 0.0
    %206 = vadd.xlane.f32.xlu0 %v205
    %v207 = vpop.xlane.xlu0 %206
    %v208 = vsel %vm192, %v204, 0.0
    %209 = vadd.xlane.f32.xlu0 %v208
    %v210 = vpop.xlane.xlu0 %209
    %v211 = vrcp.pop %v207
    %v212 = vrcp.pop %v210
    %v213 = vmul.f32 %v202, %v211
    %v214 = vmul.f32 %v204, %v212
    %v215 = vpack.c.bf16 %v214, %v213
    %216 = vrot.lane.b32.xlu0 %v140, 64
    %v217 = vpop.permute.xlu0 %216
    %v220 = vsel %vm192, %v215, 0
    %222 = vmatprep.subr.bf16.mxu0 0
    %223 = vmatpush1.bf16.msra.mxu0 %v217
    %224 = vmatprep.subr.bf16.mxu0 0
    %225 = vmatpush1.bf16.msra.mxu0 0
    %226 = vmatprep.subr.bf16.mxu0 0
    %227 = vmatpush1.bf16.msra.mxu0 0
    %228 = vmatprep.subr.bf16.mxu0 0
    %229 = vmatpush1.bf16.msra.mxu0 0
    %230 = vmatprep.subr.bf16.mxu0 0
    %231 = vmatpush1.bf16.msra.mxu0 0
    %232 = vmatprep.subr.bf16.mxu0 0
    %233 = vmatpush1.bf16.msra.mxu0 0
    %234 = vmatprep.subr.bf16.mxu0 0
    %235 = vmatpush1.bf16.msra.mxu0 0
    %236 = vmatprep.subr.bf16.mxu0 0
    %237 = vmatpush1.bf16.msra.mxu0 0
    %238 = vmatprep.subr.bf16.mxu0 0
    %239 = vmatpush1.bf16.msra.mxu0 0
    %240 = vmatprep.subr.bf16.mxu0 0
    %241 = vmatpush1.bf16.msra.mxu0 0
    %242 = vmatprep.subr.bf16.mxu0 0
    %243 = vmatpush1.bf16.msra.mxu0 0
    %244 = vmatprep.subr.bf16.mxu0 0
    %245 = vmatpush1.bf16.msra.mxu0 0
    %246 = vmatprep.subr.bf16.mxu0 0
    %247 = vmatpush1.bf16.msra.mxu0 0
    %248 = vmatprep.subr.bf16.mxu0 0
    %249 = vmatpush1.bf16.msra.mxu0 0
    %250 = vmatprep.subr.bf16.mxu0 0
    %251 = vmatpush1.bf16.msra.mxu0 0
    %252 = vmatprep.subr.bf16.mxu0 0
    %253 = vmatpush1.bf16.msra.mxu0 0
    %254 = vmatprep.mubr.bf16.mxu0 0
    %255 = vmatmul.mubr.bf16.gmra.mrb[0].mxu0 %v220
    %v256 = vpop.f32.mrb[0].mxu0
    %v257 = vadd.f32 0.0, %v256
    %v258 = vpop.f32.mrb[0].mxu0
    %v259 = vpop.f32.mrb[0].mxu0
    %v260 = vadd.f32 0.0, %v259
    %v261 = vpop.f32.mrb[0].mxu0
    %262 = vdwg.mxu0
    %v263 = vpack.c.bf16 %v260, %v257
    %v264 = vpack.c.b16 %v87, %v87
    %265 = vrot.lane.b32.xlu0 %v264, 32
    %v266 = vpop.permute.xlu0 %265
    %v268 = vsel %vm144, %v263, 0
    %vm270 = vcmask 1043456
    %v272 = vsel %vm270, %v266, 0
    %274 = vmatprep.subr.bf16.mxu0 0
    %275 = vmatpush1.bf16.msra.mxu0 %v272
    %276 = vmatprep.subr.bf16.mxu0 0
    %277 = vmatpush1.bf16.msra.mxu0 0
    %278 = vmatprep.subr.bf16.mxu0 0
    %279 = vmatpush1.bf16.msra.mxu0 0
    %280 = vmatprep.subr.bf16.mxu0 0
    %281 = vmatpush1.bf16.msra.mxu0 0
    %282 = vmatprep.subr.bf16.mxu0 0
    %283 = vmatpush1.bf16.msra.mxu0 0
    %284 = vmatprep.subr.bf16.mxu0 0
    %285 = vmatpush1.bf16.msra.mxu0 0
    %286 = vmatprep.subr.bf16.mxu0 0
    %287 = vmatpush1.bf16.msra.mxu0 0
    %288 = vmatprep.subr.bf16.mxu0 0
    %289 = vmatpush1.bf16.msra.mxu0 0
    %290 = vmatprep.subr.bf16.mxu0 0
    %291 = vmatpush1.bf16.msra.mxu0 0
    %292 = vmatprep.subr.bf16.mxu0 0
    %293 = vmatpush1.bf16.msra.mxu0 0
    %294 = vmatprep.subr.bf16.mxu0 0
    %295 = vmatpush1.bf16.msra.mxu0 0
    %296 = vmatprep.subr.bf16.mxu0 0
    %297 = vmatpush1.bf16.msra.mxu0 0
    %298 = vmatprep.subr.bf16.mxu0 0
    %299 = vmatpush1.bf16.msra.mxu0 0
    %300 = vmatprep.subr.bf16.mxu0 0
    %301 = vmatpush1.bf16.msra.mxu0 0
    %302 = vmatprep.subr.bf16.mxu0 0
    %303 = vmatpush1.bf16.msra.mxu0 0
    %304 = vmatprep.subr.bf16.mxu0 0
    %305 = vmatpush1.bf16.msra.mxu0 0
    %306 = vmatprep.mubr.bf16.mxu0 0
    %307 = vmatmul.mubr.bf16.gmra.mrb[0].mxu0 %v268
    %v308 = vpop.f32.mrb[0].mxu0
    %v309 = vadd.f32 0.0, %v308
    %v310 = vpop.f32.mrb[0].mxu0
    %v311 = vpop.f32.mrb[0].mxu0
    %v312 = vadd.f32 0.0, %v311
    %v313 = vpop.f32.mrb[0].mxu0
    %314 = vdwg.mxu0
    %317 = vrot.lane.b32.xlu0 %v309, 96
    %v318 = vpop.permute.xlu0 %317
    %319 = vrot.lane.b32.xlu0 %v312, 96
    %v320 = vpop.permute.xlu0 %319
    %v323 = vadd.f32 %v82, %v318
    %v324 = vadd.f32 %v82, %v320
    %325 = vrot.lane.b32.xlu0 %v140, 120
    %v326 = vpop.permute.xlu0 %325
    %327 = vrot.lane.b32.xlu0 %v140, 88
    %v328 = vpop.permute.xlu0 %327
    %v330 = vsel %vm144, %v326, 0
    %v333 = vsel %vm144, %v328, 0
    %335 = vmatprep.subr.bf16.mxu0 0
    %336 = vmatpush1.bf16.xpose.msra.mxu0 %v333
    %337 = vmatprep.subr.bf16.mxu0 0
    %338 = vmatpush1.bf16.xpose.msra.mxu0 0
    %339 = vmatprep.subr.bf16.mxu0 0
    %340 = vmatpush1.bf16.xpose.msra.mxu0 0
    %341 = vmatprep.subr.bf16.mxu0 0
    %342 = vmatpush1.bf16.xpose.msra.mxu0 0
    %343 = vmatprep.subr.bf16.mxu0 0
    %344 = vmatpush1.bf16.xpose.msra.mxu0 0
    %345 = vmatprep.subr.bf16.mxu0 0
    %346 = vmatpush1.bf16.xpose.msra.mxu0 0
    %347 = vmatprep.subr.bf16.mxu0 0
    %348 = vmatpush1.bf16.xpose.msra.mxu0 0
    %349 = vmatprep.subr.bf16.mxu0 0
    %350 = vmatpush1.bf16.xpose.msra.mxu0 0
    %351 = vmatprep.subr.bf16.mxu0 0
    %352 = vmatpush1.bf16.xpose.msra.mxu0 0
    %353 = vmatprep.subr.bf16.mxu0 0
    %354 = vmatpush1.bf16.xpose.msra.mxu0 0
    %355 = vmatprep.subr.bf16.mxu0 0
    %356 = vmatpush1.bf16.xpose.msra.mxu0 0
    %357 = vmatprep.subr.bf16.mxu0 0
    %358 = vmatpush1.bf16.xpose.msra.mxu0 0
    %359 = vmatprep.subr.bf16.mxu0 0
    %360 = vmatpush1.bf16.xpose.msra.mxu0 0
    %361 = vmatprep.subr.bf16.mxu0 0
    %362 = vmatpush1.bf16.xpose.msra.mxu0 0
    %363 = vmatprep.subr.bf16.mxu0 0
    %364 = vmatpush1.bf16.xpose.msra.mxu0 0
    %365 = vmatprep.subr.bf16.mxu0 0
    %366 = vmatpush1.bf16.xpose.msra.mxu0 0
    %367 = vmatprep.mubr.bf16.mxu0 0
    %368 = vmatmul.mubr.bf16.gmra.mrb[0].mxu0 %v330
    %v369 = vpop.f32.mrb[0].mxu0
    %v370 = vadd.f32 %v72, %v369
    %v371 = vpop.f32.mrb[0].mxu0
    %v372 = vpop.f32.mrb[0].mxu0
    %v373 = vadd.f32 %v73, %v372
    %v374 = vpop.f32.mrb[0].mxu0
    %375 = vdwg.mxu0
    %v376 = vsel %vm192, %v370, -inf
    %377 = vmax.xlane.f32.xlu0 %v376
    %v378 = vpop.xlane.xlu0 %377
    %v379 = vsel %vm192, %v373, -inf
    %380 = vmax.xlane.f32.xlu0 %v379
    %v381 = vpop.xlane.xlu0 %380
    %v382 = vsub.f32 %v370, %v378
    %v383 = vsub.f32 %v373, %v381
    %v384 = vmul.f32 %v382, 1.442695
    %v385 = vpow.pop %v384
    %v386 = vmul.f32 %v383, 1.442695
    %v387 = vpow.pop %v386
    %v388 = vsel %vm192, %v385, 0.0
    %389 = vadd.xlane.f32.xlu0 %v388
    %v390 = vpop.xlane.xlu0 %389
    %v391 = vsel %vm192, %v387, 0.0
    %392 = vadd.xlane.f32.xlu0 %v391
    %v393 = vpop.xlane.xlu0 %392
    %v394 = vrcp.pop %v390
    %v395 = vrcp.pop %v393
    %v396 = vmul.f32 %v385, %v394
    %v397 = vmul.f32 %v387, %v395
    %v398 = vpack.c.bf16 %v397, %v396
    %399 = vrot.lane.b32.xlu0 %v140, 56
    %v400 = vpop.permute.xlu0 %399
    %v403 = vsel %vm192, %v398, 0
    %405 = vmatprep.subr.bf16.mxu0 0
    %406 = vmatpush1.bf16.msra.mxu0 %v400
    %407 = vmatprep.subr.bf16.mxu0 0
    %408 = vmatpush1.bf16.msra.mxu0 0
    %409 = vmatprep.subr.bf16.mxu0 0
    %410 = vmatpush1.bf16.msra.mxu0 0
    %411 = vmatprep.subr.bf16.mxu0 0
    %412 = vmatpush1.bf16.msra.mxu0 0
    %413 = vmatprep.subr.bf16.mxu0 0
    %414 = vmatpush1.bf16.msra.mxu0 0
    %415 = vmatprep.subr.bf16.mxu0 0
    %416 = vmatpush1.bf16.msra.mxu0 0
    %417 = vmatprep.subr.bf16.mxu0 0
    %418 = vmatpush1.bf16.msra.mxu0 0
    %419 = vmatprep.subr.bf16.mxu0 0
    %420 = vmatpush1.bf16.msra.mxu0 0
    %421 = vmatprep.subr.bf16.mxu0 0
    %422 = vmatpush1.bf16.msra.mxu0 0
    %423 = vmatprep.subr.bf16.mxu0 0
    %424 = vmatpush1.bf16.msra.mxu0 0
    %425 = vmatprep.subr.bf16.mxu0 0
    %426 = vmatpush1.bf16.msra.mxu0 0
    %427 = vmatprep.subr.bf16.mxu0 0
    %428 = vmatpush1.bf16.msra.mxu0 0
    %429 = vmatprep.subr.bf16.mxu0 0
    %430 = vmatpush1.bf16.msra.mxu0 0
    %431 = vmatprep.subr.bf16.mxu0 0
    %432 = vmatpush1.bf16.msra.mxu0 0
    %433 = vmatprep.subr.bf16.mxu0 0
    %434 = vmatpush1.bf16.msra.mxu0 0
    %435 = vmatprep.subr.bf16.mxu0 0
    %436 = vmatpush1.bf16.msra.mxu0 0
    %437 = vmatprep.mubr.bf16.mxu0 0
    %438 = vmatmul.mubr.bf16.gmra.mrb[0].mxu0 %v403
    %v439 = vpop.f32.mrb[0].mxu0
    %v440 = vadd.f32 0.0, %v439
    %v441 = vpop.f32.mrb[0].mxu0
    %v442 = vpop.f32.mrb[0].mxu0
    %v443 = vadd.f32 0.0, %v442
    %v444 = vpop.f32.mrb[0].mxu0
    %445 = vdwg.mxu0
    %v446 = vpack.c.bf16 %v443, %v440
    %v447 = vpack.c.b16 %v88, %v88
    %448 = vrot.lane.b32.xlu0 %v447, 32
    %v449 = vpop.permute.xlu0 %448
    %v451 = vsel %vm144, %v446, 0
    %v454 = vsel %vm270, %v449, 0
    %456 = vmatprep.subr.bf16.mxu0 0
    %457 = vmatpush1.bf16.msra.mxu0 %v454
    %458 = vmatprep.subr.bf16.mxu0 0
    %459 = vmatpush1.bf16.msra.mxu0 0
    %460 = vmatprep.subr.bf16.mxu0 0
    %461 = vmatpush1.bf16.msra.mxu0 0
    %462 = vmatprep.subr.bf16.mxu0 0
    %463 = vmatpush1.bf16.msra.mxu0 0
    %464 = vmatprep.subr.bf16.mxu0 0
    %465 = vmatpush1.bf16.msra.mxu0 0
    %466 = vmatprep.subr.bf16.mxu0 0
    %467 = vmatpush1.bf16.msra.mxu0 0
    %468 = vmatprep.subr.bf16.mxu0 0
    %469 = vmatpush1.bf16.msra.mxu0 0
    %470 = vmatprep.subr.bf16.mxu0 0
    %471 = vmatpush1.bf16.msra.mxu0 0
    %472 = vmatprep.subr.bf16.mxu0 0
    %473 = vmatpush1.bf16.msra.mxu0 0
    %474 = vmatprep.subr.bf16.mxu0 0
    %475 = vmatpush1.bf16.msra.mxu0 0
    %476 = vmatprep.subr.bf16.mxu0 0
    %477 = vmatpush1.bf16.msra.mxu0 0
    %478 = vmatprep.subr.bf16.mxu0 0
    %479 = vmatpush1.bf16.msra.mxu0 0
    %480 = vmatprep.subr.bf16.mxu0 0
    %481 = vmatpush1.bf16.msra.mxu0 0
    %482 = vmatprep.subr.bf16.mxu0 0
    %483 = vmatpush1.bf16.msra.mxu0 0
    %484 = vmatprep.subr.bf16.mxu0 0
    %485 = vmatpush1.bf16.msra.mxu0 0
    %486 = vmatprep.subr.bf16.mxu0 0
    %487 = vmatpush1.bf16.msra.mxu0 0
    %488 = vmatprep.mubr.bf16.mxu0 0
    %489 = vmatmul.mubr.bf16.gmra.mrb[0].mxu0 %v451
    %v490 = vpop.f32.mrb[0].mxu0
    %v491 = vadd.f32 0.0, %v490
    %v492 = vpop.f32.mrb[0].mxu0
    %v493 = vpop.f32.mrb[0].mxu0
    %v494 = vadd.f32 0.0, %v493
    %v495 = vpop.f32.mrb[0].mxu0
    %496 = vdwg.mxu0
    %499 = vrot.lane.b32.xlu0 %v491, 96
    %v500 = vpop.permute.xlu0 %499
    %501 = vrot.lane.b32.xlu0 %v494, 96
    %v502 = vpop.permute.xlu0 %501
    %v505 = vadd.f32 %v323, %v500
    %v506 = vadd.f32 %v324, %v502
    %507 = vrot.lane.b32.xlu0 %v140, 112
    %v508 = vpop.permute.xlu0 %507
    %509 = vrot.lane.b32.xlu0 %v140, 80
    %v510 = vpop.permute.xlu0 %509
    %v512 = vsel %vm144, %v508, 0
    %v515 = vsel %vm144, %v510, 0
    %517 = vmatprep.subr.bf16.mxu0 0
    %518 = vmatpush1.bf16.xpose.msra.mxu0 %v515
    %519 = vmatprep.subr.bf16.mxu0 0
    %520 = vmatpush1.bf16.xpose.msra.mxu0 0
    %521 = vmatprep.subr.bf16.mxu0 0
    %522 = vmatpush1.bf16.xpose.msra.mxu0 0
    %523 = vmatprep.subr.bf16.mxu0 0
    %524 = vmatpush1.bf16.xpose.msra.mxu0 0
    %525 = vmatprep.subr.bf16.mxu0 0
    %526 = vmatpush1.bf16.xpose.msra.mxu0 0
    %527 = vmatprep.subr.bf16.mxu0 0
    %528 = vmatpush1.bf16.xpose.msra.mxu0 0
    %529 = vmatprep.subr.bf16.mxu0 0
    %530 = vmatpush1.bf16.xpose.msra.mxu0 0
    %531 = vmatprep.subr.bf16.mxu0 0
    %532 = vmatpush1.bf16.xpose.msra.mxu0 0
    %533 = vmatprep.subr.bf16.mxu0 0
    %534 = vmatpush1.bf16.xpose.msra.mxu0 0
    %535 = vmatprep.subr.bf16.mxu0 0
    %536 = vmatpush1.bf16.xpose.msra.mxu0 0
    %537 = vmatprep.subr.bf16.mxu0 0
    %538 = vmatpush1.bf16.xpose.msra.mxu0 0
    %539 = vmatprep.subr.bf16.mxu0 0
    %540 = vmatpush1.bf16.xpose.msra.mxu0 0
    %541 = vmatprep.subr.bf16.mxu0 0
    %542 = vmatpush1.bf16.xpose.msra.mxu0 0
    %543 = vmatprep.subr.bf16.mxu0 0
    %544 = vmatpush1.bf16.xpose.msra.mxu0 0
    %545 = vmatprep.subr.bf16.mxu0 0
    %546 = vmatpush1.bf16.xpose.msra.mxu0 0
    %547 = vmatprep.subr.bf16.mxu0 0
    %548 = vmatpush1.bf16.xpose.msra.mxu0 0
    %549 = vmatprep.mubr.bf16.mxu0 0
    %550 = vmatmul.mubr.bf16.gmra.mrb[0].mxu0 %v512
    %v551 = vpop.f32.mrb[0].mxu0
    %v552 = vadd.f32 %v72, %v551
    %v553 = vpop.f32.mrb[0].mxu0
    %v554 = vpop.f32.mrb[0].mxu0
    %v555 = vadd.f32 %v73, %v554
    %v556 = vpop.f32.mrb[0].mxu0
    %557 = vdwg.mxu0
    %v558 = vsel %vm192, %v552, -inf
    %559 = vmax.xlane.f32.xlu0 %v558
    %v560 = vpop.xlane.xlu0 %559
    %v561 = vsel %vm192, %v555, -inf
    %562 = vmax.xlane.f32.xlu0 %v561
    %v563 = vpop.xlane.xlu0 %562
    %v564 = vsub.f32 %v552, %v560
    %v565 = vsub.f32 %v555, %v563
    %v566 = vmul.f32 %v564, 1.442695
    %v567 = vpow.pop %v566
    %v568 = vmul.f32 %v565, 1.442695
    %v569 = vpow.pop %v568
    %v570 = vsel %vm192, %v567, 0.0
    %571 = vadd.xlane.f32.xlu0 %v570
    %v572 = vpop.xlane.xlu0 %571
    %v573 = vsel %vm192, %v569, 0.0
    %574 = vadd.xlane.f32.xlu0 %v573
    %v575 = vpop.xlane.xlu0 %574
    %v576 = vrcp.pop %v572
    %v577 = vrcp.pop %v575
    %v578 = vmul.f32 %v567, %v576
    %v579 = vmul.f32 %v569, %v577
    %v580 = vpack.c.bf16 %v579, %v578
    %581 = vrot.lane.b32.xlu0 %v140, 48
    %v582 = vpop.permute.xlu0 %581
    %v585 = vsel %vm192, %v580, 0
    %587 = vmatprep.subr.bf16.mxu0 0
    %588 = vmatpush1.bf16.msra.mxu0 %v582
    %589 = vmatprep.subr.bf16.mxu0 0
    %590 = vmatpush1.bf16.msra.mxu0 0
    %591 = vmatprep.subr.bf16.mxu0 0
    %592 = vmatpush1.bf16.msra.mxu0 0
    %593 = vmatprep.subr.bf16.mxu0 0
    %594 = vmatpush1.bf16.msra.mxu0 0
    %595 = vmatprep.subr.bf16.mxu0 0
    %596 = vmatpush1.bf16.msra.mxu0 0
    %597 = vmatprep.subr.bf16.mxu0 0
    %598 = vmatpush1.bf16.msra.mxu0 0
    %599 = vmatprep.subr.bf16.mxu0 0
    %600 = vmatpush1.bf16.msra.mxu0 0
    %601 = vmatprep.subr.bf16.mxu0 0
    %602 = vmatpush1.bf16.msra.mxu0 0
    %603 = vmatprep.subr.bf16.mxu0 0
    %604 = vmatpush1.bf16.msra.mxu0 0
    %605 = vmatprep.subr.bf16.mxu0 0
    %606 = vmatpush1.bf16.msra.mxu0 0
    %607 = vmatprep.subr.bf16.mxu0 0
    %608 = vmatpush1.bf16.msra.mxu0 0
    %609 = vmatprep.subr.bf16.mxu0 0
    %610 = vmatpush1.bf16.msra.mxu0 0
    %611 = vmatprep.subr.bf16.mxu0 0
    %612 = vmatpush1.bf16.msra.mxu0 0
    %613 = vmatprep.subr.bf16.mxu0 0
    %614 = vmatpush1.bf16.msra.mxu0 0
    %615 = vmatprep.subr.bf16.mxu0 0
    %616 = vmatpush1.bf16.msra.mxu0 0
    %617 = vmatprep.subr.bf16.mxu0 0
    %618 = vmatpush1.bf16.msra.mxu0 0
    %619 = vmatprep.mubr.bf16.mxu0 0
    %620 = vmatmul.mubr.bf16.gmra.mrb[0].mxu0 %v585
    %v621 = vpop.f32.mrb[0].mxu0
    %v622 = vadd.f32 0.0, %v621
    %v623 = vpop.f32.mrb[0].mxu0
    %v624 = vpop.f32.mrb[0].mxu0
    %v625 = vadd.f32 0.0, %v624
    %v626 = vpop.f32.mrb[0].mxu0
    %627 = vdwg.mxu0
    %v628 = vpack.c.bf16 %v625, %v622
    %v629 = vpack.c.b16 %v89, %v89
    %630 = vrot.lane.b32.xlu0 %v629, 32
    %v631 = vpop.permute.xlu0 %630
    %v633 = vsel %vm144, %v628, 0
    %v636 = vsel %vm270, %v631, 0
    %638 = vmatprep.subr.bf16.mxu0 0
    %639 = vmatpush1.bf16.msra.mxu0 %v636
    %640 = vmatprep.subr.bf16.mxu0 0
    %641 = vmatpush1.bf16.msra.mxu0 0
    %642 = vmatprep.subr.bf16.mxu0 0
    %643 = vmatpush1.bf16.msra.mxu0 0
    %644 = vmatprep.subr.bf16.mxu0 0
    %645 = vmatpush1.bf16.msra.mxu0 0
    %646 = vmatprep.subr.bf16.mxu0 0
    %647 = vmatpush1.bf16.msra.mxu0 0
    %648 = vmatprep.subr.bf16.mxu0 0
    %649 = vmatpush1.bf16.msra.mxu0 0
    %650 = vmatprep.subr.bf16.mxu0 0
    %651 = vmatpush1.bf16.msra.mxu0 0
    %652 = vmatprep.subr.bf16.mxu0 0
    %653 = vmatpush1.bf16.msra.mxu0 0
    %654 = vmatprep.subr.bf16.mxu0 0
    %655 = vmatpush1.bf16.msra.mxu0 0
    %656 = vmatprep.subr.bf16.mxu0 0
    %657 = vmatpush1.bf16.msra.mxu0 0
    %658 = vmatprep.subr.bf16.mxu0 0
    %659 = vmatpush1.bf16.msra.mxu0 0
    %660 = vmatprep.subr.bf16.mxu0 0
    %661 = vmatpush1.bf16.msra.mxu0 0
    %662 = vmatprep.subr.bf16.mxu0 0
    %663 = vmatpush1.bf16.msra.mxu0 0
    %664 = vmatprep.subr.bf16.mxu0 0
    %665 = vmatpush1.bf16.msra.mxu0 0
    %666 = vmatprep.subr.bf16.mxu0 0
    %667 = vmatpush1.bf16.msra.mxu0 0
    %668 = vmatprep.subr.bf16.mxu0 0
    %669 = vmatpush1.bf16.msra.mxu0 0
    %670 = vmatprep.mubr.bf16.mxu0 0
    %671 = vmatmul.mubr.bf16.gmra.mrb[0].mxu0 %v633
    %v672 = vpop.f32.mrb[0].mxu0
    %v673 = vadd.f32 0.0, %v672
    %v674 = vpop.f32.mrb[0].mxu0
    %v675 = vpop.f32.mrb[0].mxu0
    %v676 = vadd.f32 0.0, %v675
    %v677 = vpop.f32.mrb[0].mxu0
    %678 = vdwg.mxu0
    %681 = vrot.lane.b32.xlu0 %v673, 96
    %v682 = vpop.permute.xlu0 %681
    %683 = vrot.lane.b32.xlu0 %v676, 96
    %v684 = vpop.permute.xlu0 %683
    %v687 = vadd.f32 %v505, %v682
    %v688 = vadd.f32 %v506, %v684
    %689 = vrot.lane.b32.xlu0 %v140, 104
    %v690 = vpop.permute.xlu0 %689
    %691 = vrot.lane.b32.xlu0 %v140, 72
    %v692 = vpop.permute.xlu0 %691
    %v694 = vsel %vm144, %v690, 0
    %v697 = vsel %vm144, %v692, 0
    %699 = vmatprep.subr.bf16.mxu0 0
    %700 = vmatpush1.bf16.xpose.msra.mxu0 %v697
    %701 = vmatprep.subr.bf16.mxu0 0
    %702 = vmatpush1.bf16.xpose.msra.mxu0 0
    %703 = vmatprep.subr.bf16.mxu0 0
    %704 = vmatpush1.bf16.xpose.msra.mxu0 0
    %705 = vmatprep.subr.bf16.mxu0 0
    %706 = vmatpush1.bf16.xpose.msra.mxu0 0
    %707 = vmatprep.subr.bf16.mxu0 0
    %708 = vmatpush1.bf16.xpose.msra.mxu0 0
    %709 = vmatprep.subr.bf16.mxu0 0
    %710 = vmatpush1.bf16.xpose.msra.mxu0 0
    %711 = vmatprep.subr.bf16.mxu0 0
    %712 = vmatpush1.bf16.xpose.msra.mxu0 0
    %713 = vmatprep.subr.bf16.mxu0 0
    %714 = vmatpush1.bf16.xpose.msra.mxu0 0
    %715 = vmatprep.subr.bf16.mxu0 0
    %716 = vmatpush1.bf16.xpose.msra.mxu0 0
    %717 = vmatprep.subr.bf16.mxu0 0
    %718 = vmatpush1.bf16.xpose.msra.mxu0 0
    %719 = vmatprep.subr.bf16.mxu0 0
    %720 = vmatpush1.bf16.xpose.msra.mxu0 0
    %721 = vmatprep.subr.bf16.mxu0 0
    %722 = vmatpush1.bf16.xpose.msra.mxu0 0
    %723 = vmatprep.subr.bf16.mxu0 0
    %724 = vmatpush1.bf16.xpose.msra.mxu0 0
    %725 = vmatprep.subr.bf16.mxu0 0
    %726 = vmatpush1.bf16.xpose.msra.mxu0 0
    %727 = vmatprep.subr.bf16.mxu0 0
    %728 = vmatpush1.bf16.xpose.msra.mxu0 0
    %729 = vmatprep.subr.bf16.mxu0 0
    %730 = vmatpush1.bf16.xpose.msra.mxu0 0
    %731 = vmatprep.mubr.bf16.mxu0 0
    %732 = vmatmul.mubr.bf16.gmra.mrb[0].mxu0 %v694
    %v733 = vpop.f32.mrb[0].mxu0
    %v734 = vadd.f32 %v72, %v733
    %v735 = vpop.f32.mrb[0].mxu0
    %v736 = vpop.f32.mrb[0].mxu0
    %v737 = vadd.f32 %v73, %v736
    %v738 = vpop.f32.mrb[0].mxu0
    %739 = vdwg.mxu0
    %v740 = vsel %vm192, %v734, -inf
    %741 = vmax.xlane.f32.xlu0 %v740
    %v742 = vpop.xlane.xlu0 %741
    %v743 = vsel %vm192, %v737, -inf
    %744 = vmax.xlane.f32.xlu0 %v743
    %v745 = vpop.xlane.xlu0 %744
    %v746 = vsub.f32 %v734, %v742
    %v747 = vsub.f32 %v737, %v745
    %v748 = vmul.f32 %v746, 1.442695
    %v749 = vpow.pop %v748
    %v750 = vmul.f32 %v747, 1.442695
    %v751 = vpow.pop %v750
    %v752 = vsel %vm192, %v749, 0.0
    %753 = vadd.xlane.f32.xlu0 %v752
    %v754 = vpop.xlane.xlu0 %753
    %v755 = vsel %vm192, %v751, 0.0
    %756 = vadd.xlane.f32.xlu0 %v755
    %v757 = vpop.xlane.xlu0 %756
    %v758 = vrcp.pop %v754
    %v759 = vrcp.pop %v757
    %v760 = vmul.f32 %v749, %v758
    %v761 = vmul.f32 %v751, %v759
    %v762 = vpack.c.bf16 %v761, %v760
    %763 = vrot.lane.b32.xlu0 %v140, 40
    %v764 = vpop.permute.xlu0 %763
    %v767 = vsel %vm192, %v762, 0
    %769 = vmatprep.subr.bf16.mxu0 0
    %770 = vmatpush1.bf16.msra.mxu0 %v764
    %771 = vmatprep.subr.bf16.mxu0 0
    %772 = vmatpush1.bf16.msra.mxu0 0
    %773 = vmatprep.subr.bf16.mxu0 0
    %774 = vmatpush1.bf16.msra.mxu0 0
    %775 = vmatprep.subr.bf16.mxu0 0
    %776 = vmatpush1.bf16.msra.mxu0 0
    %777 = vmatprep.subr.bf16.mxu0 0
    %778 = vmatpush1.bf16.msra.mxu0 0
    %779 = vmatprep.subr.bf16.mxu0 0
    %780 = vmatpush1.bf16.msra.mxu0 0
    %781 = vmatprep.subr.bf16.mxu0 0
    %782 = vmatpush1.bf16.msra.mxu0 0
    %783 = vmatprep.subr.bf16.mxu0 0
    %784 = vmatpush1.bf16.msra.mxu0 0
    %785 = vmatprep.subr.bf16.mxu0 0
    %786 = vmatpush1.bf16.msra.mxu0 0
    %787 = vmatprep.subr.bf16.mxu0 0
    %788 = vmatpush1.bf16.msra.mxu0 0
    %789 = vmatprep.subr.bf16.mxu0 0
    %790 = vmatpush1.bf16.msra.mxu0 0
    %791 = vmatprep.subr.bf16.mxu0 0
    %792 = vmatpush1.bf16.msra.mxu0 0
    %793 = vmatprep.subr.bf16.mxu0 0
    %794 = vmatpush1.bf16.msra.mxu0 0
    %795 = vmatprep.subr.bf16.mxu0 0
    %796 = vmatpush1.bf16.msra.mxu0 0
    %797 = vmatprep.subr.bf16.mxu0 0
    %798 = vmatpush1.bf16.msra.mxu0 0
    %799 = vmatprep.subr.bf16.mxu0 0
    %800 = vmatpush1.bf16.msra.mxu0 0
    %801 = vmatprep.mubr.bf16.mxu0 0
    %802 = vmatmul.mubr.bf16.gmra.mrb[0].mxu0 %v767
    %v803 = vpop.f32.mrb[0].mxu0
    %v804 = vadd.f32 0.0, %v803
    %v805 = vpop.f32.mrb[0].mxu0
    %v806 = vpop.f32.mrb[0].mxu0
    %v807 = vadd.f32 0.0, %v806
    %v808 = vpop.f32.mrb[0].mxu0
    %809 = vdwg.mxu0
    %v810 = vpack.c.bf16 %v807, %v804
    %v811 = vpack.c.b16 %v90, %v90
    %812 = vrot.lane.b32.xlu0 %v811, 32
    %v813 = vpop.permute.xlu0 %812
    %v815 = vsel %vm144, %v810, 0
    %v818 = vsel %vm270, %v813, 0
    %820 = vmatprep.subr.bf16.mxu0 0
    %821 = vmatpush1.bf16.msra.mxu0 %v818
    %822 = vmatprep.subr.bf16.mxu0 0
    %823 = vmatpush1.bf16.msra.mxu0 0
    %824 = vmatprep.subr.bf16.mxu0 0
    %825 = vmatpush1.bf16.msra.mxu0 0
    %826 = vmatprep.subr.bf16.mxu0 0
    %827 = vmatpush1.bf16.msra.mxu0 0
    %828 = vmatprep.subr.bf16.mxu0 0
    %829 = vmatpush1.bf16.msra.mxu0 0
    %830 = vmatprep.subr.bf16.mxu0 0
    %831 = vmatpush1.bf16.msra.mxu0 0
    %832 = vmatprep.subr.bf16.mxu0 0
    %833 = vmatpush1.bf16.msra.mxu0 0
    %834 = vmatprep.subr.bf16.mxu0 0
    %835 = vmatpush1.bf16.msra.mxu0 0
    %836 = vmatprep.subr.bf16.mxu0 0
    %837 = vmatpush1.bf16.msra.mxu0 0
    %838 = vmatprep.subr.bf16.mxu0 0
    %839 = vmatpush1.bf16.msra.mxu0 0
    %840 = vmatprep.subr.bf16.mxu0 0
    %841 = vmatpush1.bf16.msra.mxu0 0
    %842 = vmatprep.subr.bf16.mxu0 0
    %843 = vmatpush1.bf16.msra.mxu0 0
    %844 = vmatprep.subr.bf16.mxu0 0
    %845 = vmatpush1.bf16.msra.mxu0 0
    %846 = vmatprep.subr.bf16.mxu0 0
    %847 = vmatpush1.bf16.msra.mxu0 0
    %848 = vmatprep.subr.bf16.mxu0 0
    %849 = vmatpush1.bf16.msra.mxu0 0
    %850 = vmatprep.subr.bf16.mxu0 0
    %851 = vmatpush1.bf16.msra.mxu0 0
    %852 = vmatprep.mubr.bf16.mxu0 0
    %853 = vmatmul.mubr.bf16.gmra.mrb[0].mxu0 %v815
    %v854 = vpop.f32.mrb[0].mxu0
    %v855 = vadd.f32 0.0, %v854
    %v856 = vpop.f32.mrb[0].mxu0
    %v857 = vpop.f32.mrb[0].mxu0
    %v858 = vadd.f32 0.0, %v857
    %v859 = vpop.f32.mrb[0].mxu0
    %860 = vdwg.mxu0
    %863 = vrot.lane.b32.xlu0 %v855, 96
    %v864 = vpop.permute.xlu0 %863
    %865 = vrot.lane.b32.xlu0 %v858, 96
    %v866 = vpop.permute.xlu0 %865
    %v869 = vadd.f32 %v687, %v864
    %v870 = vadd.f32 %v688, %v866
    %873 = vrot.lane.b32.xlu0 %v869, 32
    %v874 = vpop.permute.xlu0 %873
    %875 = vrot.lane.b32.xlu0 %v870, 32
    %v876 = vpop.permute.xlu0 %875
    %v879 = vadd.f32 %v22, %v874
    %v880 = vadd.f32 %v23, %v876
    %v881 = vsel %vm95, %v879, 0.0
    %882 = vadd.xlane.f32.xlu0 %v881
    %v883 = vpop.xlane.xlu0 %882
    %v884 = vsel %vm95, %v880, 0.0
    %885 = vadd.xlane.f32.xlu0 %v884
    %v886 = vpop.xlane.xlu0 %885
    %v887 = vrcp.pop 32.0
    %v888 = vmul.f32 %v883, %v887
    %v889 = vmul.f32 %v886, %v887
    %v890 = vsub.f32 %v879, %v888
    %v891 = vsub.f32 %v880, %v889
    %v892 = vmul.f32 %v890, %v890
    %v893 = vmul.f32 %v891, %v891
    %v894 = vsel %vm95, %v892, 0.0
    %895 = vadd.xlane.f32.xlu0 %v894
    %v896 = vpop.xlane.xlu0 %895
    %v897 = vsel %vm95, %v893, 0.0
    %898 = vadd.xlane.f32.xlu0 %v897
    %v899 = vpop.xlane.xlu0 %898
    %v900 = vmul.f32 %v896, %v887
    %v901 = vmul.f32 %v899, %v887
    %v902 = vadd.f32 %v900, 1e-05
    %v903 = vadd.f32 %v901, 1e-05
    %v904 = vrsqrt.pop %v902
    %v905 = vrsqrt.pop %v903
    %v906 = vmul.f32 %v890, %v904
    %v907 = vmul.f32 %v891, %v905
    %v908 = vlaneseq
    %v909 = vshrl.u32 %v908, 7
    %v910 = vsub.s32 1, %v909
    %v911 = vrot.slane %v24, %v910
    %v912 = vmul.f32 %v906, %v911
    %v913 = vmul.f32 %v907, %v911
    %915 = vrot.lane.b32.xlu0 %v911, 96
    %v916 = vpop.permute.xlu0 %915
    %v918 = vadd.f32 %v912, %v916
    %v919 = vadd.f32 %v913, %v916
    %v920 = vld [vmem:[%s3] sm:$0xf]
    %v921 = vld [vmem:[%s3 + $0x4] sm:$0xf]
    %v922 = vld [vmem:[%s3 + $0x8] sm:$0xf]
    %v923 = vld [vmem:[%s3 + $0xc] sm:$0xf]
    %v924 = vpack.c.bf16 %v919, %v918
    %v925 = vlaneseq
    %v926 = vshrl.u32 %v925, 7
    %v927 = vsub.s32 2, %v926
    %v928 = vrot.slane %v24, %v927
    %v933 = vunpack.c.l.b16 %v920
    %v934 = vunpack.c.l.b16 %v921
    %v935 = vunpack.c.l.b16 %v922
    %v936 = vunpack.c.l.b16 %v923
    %v937 = vpack.c.b16 %v934, %v933
    %v938 = vpack.c.b16 %v936, %v935
    %v942 = vsel %vm95, %v924, 0
    %944 = vmatprep.subr.bf16.mxu0 0
    %945 = vmatpush1.bf16.msra.mxu0 %v937
    %946 = vmatprep.subr.bf16.mxu0 0
    %947 = vmatpush1.bf16.msra.mxu0 %v938
    %948 = vmatprep.subr.bf16.mxu0 0
    %949 = vmatpush1.bf16.msra.mxu0 0
    %950 = vmatprep.subr.bf16.mxu0 0
    %951 = vmatpush1.bf16.msra.mxu0 0
    %952 = vmatprep.subr.bf16.mxu0 0
    %953 = vmatpush1.bf16.msra.mxu0 0
    %954 = vmatprep.subr.bf16.mxu0 0
    %955 = vmatpush1.bf16.msra.mxu0 0
    %956 = vmatprep.subr.bf16.mxu0 0
    %957 = vmatpush1.bf16.msra.mxu0 0
    %958 = vmatprep.subr.bf16.mxu0 0
    %959 = vmatpush1.bf16.msra.mxu0 0
    %960 = vmatprep.subr.bf16.mxu0 0
    %961 = vmatpush1.bf16.msra.mxu0 0
    %962 = vmatprep.subr.bf16.mxu0 0
    %963 = vmatpush1.bf16.msra.mxu0 0
    %964 = vmatprep.subr.bf16.mxu0 0
    %965 = vmatpush1.bf16.msra.mxu0 0
    %966 = vmatprep.subr.bf16.mxu0 0
    %967 = vmatpush1.bf16.msra.mxu0 0
    %968 = vmatprep.subr.bf16.mxu0 0
    %969 = vmatpush1.bf16.msra.mxu0 0
    %970 = vmatprep.subr.bf16.mxu0 0
    %971 = vmatpush1.bf16.msra.mxu0 0
    %972 = vmatprep.subr.bf16.mxu0 0
    %973 = vmatpush1.bf16.msra.mxu0 0
    %974 = vmatprep.subr.bf16.mxu0 0
    %975 = vmatpush1.bf16.msra.mxu0 0
    %976 = vmatprep.mubr.bf16.mxu0 0
    %977 = vmatmul.mubr.bf16.gmra.mrb[0].mxu0 %v942
    %v978 = vpop.f32.mrb[0].mxu0
    %v979 = vadd.f32 %v928, %v978
    %v980 = vpop.f32.mrb[0].mxu0
    %v981 = vpop.f32.mrb[0].mxu0
    %v982 = vadd.f32 %v928, %v981
    %v983 = vpop.f32.mrb[0].mxu0
    %984 = vdwg.mxu0
    %v985 = vmax.f32 %v979, 0.0
    %v986 = vmax.f32 %v982, 0.0
    %v987 = vpack.c.bf16 %v986, %v985
    %988 = vrot.lane.b32.xlu0 %v937, 64
    %v989 = vpop.permute.xlu0 %988
    %990 = vrot.lane.b32.xlu0 %v938, 64
    %v991 = vpop.permute.xlu0 %990
    %993 = vrot.lane.b32.xlu0 %v928, 64
    %v994 = vpop.permute.xlu0 %993
    %vm996 = vcmask 523264
    %v998 = vsel %vm996, %v987, 0
    %v1001 = vsel %vm996, %v989, 0
    %v1004 = vsel %vm996, %v991, 0
    %1006 = vmatprep.subr.bf16.mxu0 0
    %1007 = vmatpush1.bf16.xpose.msra.mxu0 %v1001
    %1008 = vmatprep.subr.bf16.mxu0 0
    %1009 = vmatpush1.bf16.xpose.msra.mxu0 %v1004
    %1010 = vmatprep.subr.bf16.mxu0 0
    %1011 = vmatpush1.bf16.xpose.msra.mxu0 0
    %1012 = vmatprep.subr.bf16.mxu0 0
    %1013 = vmatpush1.bf16.xpose.msra.mxu0 0
    %1014 = vmatprep.subr.bf16.mxu0 0
    %1015 = vmatpush1.bf16.xpose.msra.mxu0 0
    %1016 = vmatprep.subr.bf16.mxu0 0
    %1017 = vmatpush1.bf16.xpose.msra.mxu0 0
    %1018 = vmatprep.subr.bf16.mxu0 0
    %1019 = vmatpush1.bf16.xpose.msra.mxu0 0
    %1020 = vmatprep.subr.bf16.mxu0 0
    %1021 = vmatpush1.bf16.xpose.msra.mxu0 0
    %1022 = vmatprep.subr.bf16.mxu0 0
    %1023 = vmatpush1.bf16.xpose.msra.mxu0 0
    %1024 = vmatprep.subr.bf16.mxu0 0
    %1025 = vmatpush1.bf16.xpose.msra.mxu0 0
    %1026 = vmatprep.subr.bf16.mxu0 0
    %1027 = vmatpush1.bf16.xpose.msra.mxu0 0
    %1028 = vmatprep.subr.bf16.mxu0 0
    %1029 = vmatpush1.bf16.xpose.msra.mxu0 0
    %1030 = vmatprep.subr.bf16.mxu0 0
    %1031 = vmatpush1.bf16.xpose.msra.mxu0 0
    %1032 = vmatprep.subr.bf16.mxu0 0
    %1033 = vmatpush1.bf16.xpose.msra.mxu0 0
    %1034 = vmatprep.subr.bf16.mxu0 0
    %1035 = vmatpush1.bf16.xpose.msra.mxu0 0
    %1036 = vmatprep.subr.bf16.mxu0 0
    %1037 = vmatpush1.bf16.xpose.msra.mxu0 0
    %1038 = vmatprep.mubr.bf16.mxu0 0
    %1039 = vmatmul.mubr.bf16.gmra.mrb[0].mxu0 %v998
    %v1040 = vpop.f32.mrb[0].mxu0
    %v1041 = vadd.f32 %v994, %v1040
    %v1042 = vpop.f32.mrb[0].mxu0
    %v1043 = vpop.f32.mrb[0].mxu0
    %v1044 = vadd.f32 %v994, %v1043
    %v1045 = vpop.f32.mrb[0].mxu0
    %1046 = vdwg.mxu0
    %v1047 = vadd.f32 %v918, %v1041
    %v1048 = vadd.f32 %v919, %v1044
    %v1049 = vsel %vm95, %v1047, 0.0
    %1050 = vadd.xlane.f32.xlu0 %v1049
    %v1051 = vpop.xlane.xlu0 %1050
    %v1052 = vsel %vm95, %v1048, 0.0
    %1053 = vadd.xlane.f32.xlu0 %v1052
    %v1054 = vpop.xlane.xlu0 %1053
    %v1055 = vmul.f32 %v1051, %v887
    %v1056 = vmul.f32 %v1054, %v887
    %v1057 = vsub.f32 %v1047, %v1055
    %v1058 = vsub.f32 %v1048, %v1056
    %v1059 = vmul.f32 %v1057, %v1057
    %v1060 = vmul.f32 %v1058, %v1058
    %v1061 = vsel %vm95, %v1059, 0.0
    %1062 = vadd.xlane.f32.xlu0 %v1061
    %v1063 = vpop.xlane.xlu0 %1062
    %v1064 = vsel %vm95, %v1060, 0.0
    %1065 = vadd.xlane.f32.xlu0 %v1064
    %v1066 = vpop.xlane.xlu0 %1065
    %v1067 = vmul.f32 %v1063, %v887
    %v1068 = vmul.f32 %v1066, %v887
    %v1069 = vadd.f32 %v1067, 1e-05
    %v1070 = vadd.f32 %v1068, 1e-05
    %v1071 = vrsqrt.pop %v1069
    %v1072 = vrsqrt.pop %v1070
    %v1073 = vmul.f32 %v1057, %v1071
    %v1074 = vmul.f32 %v1058, %v1072
    %1075 = vrot.lane.b32.xlu0 %v911, 64
    %v1076 = vpop.permute.xlu0 %1075
    %v1078 = vmul.f32 %v1073, %v1076
    %v1079 = vmul.f32 %v1074, %v1076
    %1080 = vrot.lane.b32.xlu0 %v911, 32
    %v1081 = vpop.permute.xlu0 %1080
    %v1083 = vadd.f32 %v1078, %v1081
    %v1084 = vadd.f32 %v1079, %v1081
    %1085 = vst.msk [vmem:[#allocation2] sm:$0xff] %vm95, %v1083
    %1086 = vst.msk [vmem:[#allocation2 + $0x8] sm:$0xff] %vm95, %v1084
    // Predicated region
    $region22: #{transformer_encoder_layer.1} parent=1 // pred_check
      _
    $region23: #{transformer_encoder_layer.1} parent=1 // pred_check_branch
      %1088 = sbr.rel (0) target = $region25
    $region24: #{transformer_encoder_layer.1} parent=1 // pred_region
      %s1090 = ssub.s32 256, 256
      %1091 = vsyncadd [#allocation3], %s1090
      %s1092 = sshll.u32 [#allocation2], 4
      %s1093 = int_to_ptr.vmem [resolvable:$true] %s1092
      %1098 = dma.vmem_to_hbm [thread:$0]  %s1093, 256, %s5, [#allocation3], 128, 128, 8
    $region25: #{transformer_encoder_layer.1} parent=1 // pred_fallthru
      _
    // Predicated region
    $region26: #{transformer_encoder_layer.1} parent=1 // pred_check
      _
    $region27: #{transformer_encoder_layer.1} parent=1 // pred_check_branch
      %1100 = sbr.rel (0) target = $region29
    $region28: #{transformer_encoder_layer.1} parent=1 // pred_region
      %1101 = dma.done [#allocation3], 256
    $region29: #{transformer_encoder_layer.1} parent=1 // pred_fallthru
      _
    %1102 = vsyncpa [#allocation3], 1

</llo_original>
